<compile_context>
chip_gen: v7x
topology: tpu7x:2x2x1
jax: 0.10.0
libtpu: 0.0.40
codegen_flags: <defaults>
</compile_context>

<pallas_src>
import functools
import math

import jax
import jax.numpy as jnp
import numpy as np
from jax import lax
from jax.experimental import pallas as pl
from jax.experimental.pallas import tpu as pltpu


# ----------------------------------------------------------------------------
# Fused kernel: per batch tile, compute u_predict in VMEM and run routing on it.
# ----------------------------------------------------------------------------
def _caps_fused_kernel(x_ref, w_ref, b0_ref, v_ref, *, n_iterations, output_caps,
                       output_dim, out_cols):
    # x_ref : (IC, TB, ID)      bf16 input-capsule tile (IC-major)
    # w_ref : (IC, ID, OC*OD)   bf16 weight slab, resident across the grid
    # b0_ref: (IC, OC)          f32 routing prior logits (AgreementRouting's `b`)
    # v_ref : (TB, out_cols)    f32 lane-dense (128-padded) output tile
    OC, OD = output_caps, output_dim
    OCOD = OC * OD
    x = x_ref[...]
    w = w_ref[...]
    IC, TB, _ = x.shape

    # ---- capsule predictions on the MXU: u[i, b, :] = x[i, b, :] @ w[i] -------
    # bf16 operands, f32 accumulation; u lives only in VMEM (never hits HBM).
    u = jnp.einsum("ibk,ikj->ibj", x, w,
                   preferred_element_type=jnp.float32)          # (IC, TB, OCOD) f32

    # ---- block-indicator matrices for per-output-capsule broadcast / reduce ---
    #   E [o, j] = 1  iff  j in [o*OD, (o+1)*OD)      (OC,   OCOD)
    #   ET[j, o] = E[o, j]                            (OCOD, OC)
    # Every "per output capsule" broadcast or OD-block reduction becomes a tiny
    # lane-dense MXU matmul instead of lane-sparse slicing/reshaping of u.
    oc_r = lax.broadcasted_iota(jnp.int32, (OC, OCOD), 0)
    j_r = lax.broadcasted_iota(jnp.int32, (OC, OCOD), 1)
    E = ((j_r >= oc_r * OD) & (j_r < (oc_r + 1) * OD)).astype(jnp.float32)
    j_c = lax.broadcasted_iota(jnp.int32, (OCOD, OC), 0)
    oc_c = lax.broadcasted_iota(jnp.int32, (OCOD, OC), 1)
    ET = ((j_c >= oc_c * OD) & (j_c < (oc_c + 1) * OD)).astype(jnp.float32)

    def blk_dot(x3, m2):
        # (A, B, K) x (K, N) -> (A, B, N).  The collapse of the two leading dims
        # is sublane-aligned (TB is a multiple of 8 or the full batch), so the
        # reshapes are layout no-ops and the contraction runs on the MXU.
        a, bdim, k = x3.shape
        y = jnp.dot(x3.reshape(a * bdim, k), m2,
                    preferred_element_type=jnp.float32)
        return y.reshape(a, bdim, m2.shape[1])

    def softmax_oc(logits):                                     # (IC, TB, OC)
        m = jnp.max(logits, axis=-1, keepdims=True)
        e = jnp.exp(logits - m)
        den = jnp.sum(e, axis=-1, keepdims=True)
        return e * pl.reciprocal(den, approx=True)              # EUP, off the VALU path

    def route(b):
        c = softmax_oc(b)                                       # (IC, TB, OC)
        c_full = blk_dot(c, E)                                  # (IC, TB, OCOD): c bcast over OD
        s = jnp.sum(c_full * u, axis=0)                         # (TB, OCOD): sum over input caps
        # squash: per-output-capsule |s|^2 via an OD-block reduction on the MXU.
        n2 = jnp.dot(s * s, ET, preferred_element_type=jnp.float32)         # (TB, OC)
        # scale = |s|^2 / ((1+|s|^2) * |s|); eps guards zero / padded samples.
        scale = n2 * lax.rsqrt(n2 + 1e-12) * pl.reciprocal(1.0 + n2, approx=True)
        scale_full = jnp.dot(scale, E, preferred_element_type=jnp.float32)  # (TB, OCOD)
        return s * scale_full                                   # (TB, OCOD)

    b_init = jnp.broadcast_to(b0_ref[...][:, None, :], (IC, TB, OC))        # (IC, TB, OC)
    v_init = route(b_init)

    def agreement_iter(_, carry):
        b, v = carry
        # b[i, b, o] += sum_d u[i, b, o, d] * v[b, o, d]   (OD-block reduce on MXU)
        b = b + blk_dot(u * v[None, :, :], ET)                  # (IC, TB, OC)
        return b, route(b)

    _, v = lax.fori_loop(0, n_iterations, agreement_iter, (b_init, v_init),
                         unroll=True)

    # Single unmasked lane-dense store of the whole (TB, out_cols) tile.
    if out_cols > OCOD:
        v = jnp.concatenate(
            [v, jnp.zeros((TB, out_cols - OCOD), jnp.float32)], axis=-1)
    v_ref[...] = v.astype(v_ref.dtype)


# ----------------------------------------------------------------------------
# Tiling helpers (generation-aware)
# ----------------------------------------------------------------------------
def _vmem_capacity_bytes():
    try:
        cap = getattr(pltpu.get_tpu_info(), "vmem_capacity_bytes", None)
        if cap:
            return int(cap)
    except Exception:
        pass
    return 64 * 1024 * 1024          # conservative fallback (v7x per-core budget)


def _select_batch_tile(B, IC, ID, OC, OD, vmem_cap):
    """Largest MXU-friendly batch tile whose working set fits the VMEM budget."""
    OCOD = OC * OD
    OCOD_pad = ((OCOD + 127) // 128) * 128
    budget = int(0.75 * vmem_cap)
    # Resident across the grid (constant index_map inputs are still double-buffered).
    fixed = 2 * (2 * IC * ID * OCOD) + 2 * (4 * IC * OC)
    # Bytes that scale with one batch row of the tile.
    per_row = (2 * (2 * IC * ID)            # bf16 x tile, double-buffered
               + 2 * (4 * OCOD_pad)         # f32 out tile, double-buffered
               + 3 * (4 * IC * OCOD)        # u slab + ~2 routing temporaries (f32)
               + 4 * (4 * IC * OC))         # b / c / agreement slabs (f32)
    tb = (budget - fixed) // max(per_row, 1)
    tb = int(max(16, min(128, tb)))         # 128 rows fill the MXU M dim on all gens
    tb -= tb % 16                           # keep tiled blocks bf16-pack aligned
    b_ceil = max(8, ((B + 7) // 8) * 8)     # whole (sublane-padded) batch in one tile
    if b_ceil <= tb:
        if B >= 32:
            # >= 2 grid steps so both v7x TensorCores get work / pipelining overlaps.
            tb = max(16, ((-(-B // 2) + 15) // 16) * 16)
        else:
            tb = b_ceil                      # single tile == full (padded) batch dim
    return tb


# ----------------------------------------------------------------------------
# CapsLayer forward (wrapper)
# ----------------------------------------------------------------------------
def caps_layer_forward(caps_output, weights, b_prior, output_caps, output_dim,
                       n_iterations=3):
    B, IC, ID = caps_output.shape
    OC, OD = output_caps, output_dim
    OCOD = OC * OD
    assert weights.shape == (IC, ID, OCOD)
    assert b_prior.shape == (IC, OC)

    OCOD_pad = ((OCOD + 127) // 128) * 128          # unmasked 128-lane output stores
    vmem_cap = _vmem_capacity_bytes()
    TB = _select_batch_tile(B, IC, ID, OC, OD, vmem_cap)
    Bp = ((B + TB - 1) // TB) * TB

    x = caps_output
    if Bp != B:
        x = jnp.pad(x, ((0, Bp - B), (0, 0), (0, 0)))
    # IC-major + bf16 operands (MXU-native on all generations); f32 accumulation
    # and all routing math happen in-kernel in f32.
    x_t = jnp.transpose(x, (1, 0, 2)).astype(jnp.bfloat16)          # (IC, Bp, ID)
    w16 = weights.astype(jnp.bfloat16)                               # (IC, ID, OCOD)
    prior = b_prior.astype(jnp.float32)                              # (IC, OC)

    kernel = functools.partial(_caps_fused_kernel, n_iterations=n_iterations,
                               output_caps=OC, output_dim=OD, out_cols=OCOD_pad)

    cost = pl.CostEstimate(
        flops=int(2 * Bp * IC * ID * OCOD                            # predictions
                  + (n_iterations + 1) * 8 * Bp * IC * OCOD),        # routing (approx)
        transcendentals=int((n_iterations + 1) * Bp * IC * OC),      # softmax exps
        bytes_accessed=int(2 * IC * Bp * ID + 2 * IC * ID * OCOD
                           + 4 * IC * OC + 4 * Bp * OCOD_pad),
    )

    v_flat = pl.pallas_call(
        kernel,
        out_shape=jax.ShapeDtypeStruct((Bp, OCOD_pad), jnp.float32),
        grid_spec=pltpu.PrefetchScalarGridSpec(
            num_scalar_prefetch=0,
            grid=(Bp // TB,),
            in_specs=[
                pl.BlockSpec((IC, TB, ID), lambda b: (0, b, 0)),     # x batch tile
                pl.BlockSpec((IC, ID, OCOD), lambda b: (0, 0, 0)),   # resident weights
                pl.BlockSpec((IC, OC), lambda b: (0, 0)),            # resident prior
            ],
            out_specs=pl.BlockSpec((TB, OCOD_pad), lambda b: (b, 0)),
        ),
        compiler_params=pltpu.CompilerParams(
            dimension_semantics=("parallel",),
            vmem_limit_bytes=int(0.9 * vmem_cap),
        ),
        cost_estimate=cost,
    )(x_t, w16, prior)

    return v_flat[:B, :OCOD].reshape(B, OC, OD).astype(caps_output.dtype)


# ----------------------------------------------------------------------------
# Pure-JAX reference (mirrors the PyTorch code exactly)
# ----------------------------------------------------------------------------
def _ref_forward(caps_output, weights, b_prior, output_caps, output_dim,
                 n_iterations=3):
    B, IC, ID = caps_output.shape
    u = jnp.einsum("bik,ikj->bij", caps_output, weights)
    u = u.reshape(B, IC, output_caps, output_dim)

    def squash(s):
        n2 = jnp.sum(s * s, axis=-1, keepdims=True)
        n = jnp.sqrt(n2)
        return s * (n2 / (1.0 + n2) / n)

    c = jax.nn.softmax(b_prior, axis=-1)
    s = jnp.sum(c[None, :, :, None] * u, axis=1)
    v = squash(s)
    b_batch = jnp.broadcast_to(b_prior[None], (B, IC, output_caps))
    for _ in range(n_iterations):
        b_batch = b_batch + jnp.sum(u * v[:, None, :, :], axis=-1)
        c = jax.nn.softmax(b_batch, axis=-1)[..., None]
        s = jnp.sum(c * u, axis=1)
        v = squash(s)
    return v


if __name__ == "__main__":
    # Small shapes consistent with the module's forward.
    B, input_caps, input_dim = 2, 8, 16
    output_caps, output_dim = 4, 8
    n_iterations = 3

    key = jax.random.PRNGKey(0)
    k_x, k_w = jax.random.split(key)

    # Parameter init mirrors reset_parameters: uniform(-stdv, stdv).
    stdv = 1.0 / math.sqrt(input_caps)
    weights = jax.random.uniform(
        k_w, (input_caps, input_dim, output_caps * output_dim),
        minval=-stdv, maxval=stdv, dtype=jnp.float32)
    b_prior = jnp.zeros((input_caps, output_caps), dtype=jnp.float32)  # routing logits

    caps_output = jax.random.normal(k_x, (B, input_caps, input_dim), dtype=jnp.float32)

    v = caps_layer_forward(caps_output, weights, b_prior,
                           output_caps, output_dim, n_iterations)
    v = jax.block_until_ready(v)

    v_ref = _ref_forward(caps_output, weights, b_prior,
                         output_caps, output_dim, n_iterations)

    # Tolerance accounts for bf16 MXU operands (prediction + block-indicator
    # contractions) and approx EUP reciprocals in softmax/squash — the ~1e-2
    # drift flagged (and accepted) in the perf review.
    np.testing.assert_allclose(np.asarray(v), np.asarray(v_ref), rtol=3e-2, atol=2e-2)

    print("KERNEL_OK")
</pallas_src>

<mosaic_0001>
module attributes {stable_mosaic.version = 11 : i64} {
  func.func @_caps_fused_kernel(%arg0: i32, %arg1: memref<8x8x16xbf16, #tpu.memory_space<vmem>>, %arg2: memref<8x16x32xbf16, #tpu.memory_space<vmem>>, %arg3: memref<8x4xf32, #tpu.memory_space<vmem>>, %arg4: memref<8x128xf32, #tpu.memory_space<vmem>>) attributes {dimension_semantics = [#tpu.dimension_semantics<parallel>], iteration_bounds = array<i64: 1>, scalar_prefetch = 0 : i64, scratch_operands = 0 : i64, tpu.core_type = #tpu.core_type<tc>, window_params = [{transform_indices = @transform_0, window_bounds = array<i64: 8, 8, 16>}, {pipeline_mode = #tpu.pipeline_mode<synchronous>, transform_indices = @transform_1, window_bounds = array<i64: 8, 16, 32>}, {pipeline_mode = #tpu.pipeline_mode<synchronous>, transform_indices = @transform_2, window_bounds = array<i64: 8, 4>}, {transform_indices = @transform_3, window_bounds = array<i64: 8, 128>}]} {
    %c0 = arith.constant 0 : index
    %c0_0 = arith.constant 0 : index
    %c0_1 = arith.constant 0 : index
    %0 = vector.load %arg1[%c0, %c0_0, %c0_1] : memref<8x8x16xbf16, #tpu.memory_space<vmem>>, vector<8x8x16xbf16>
    %c0_2 = arith.constant 0 : index
    %c0_3 = arith.constant 0 : index
    %c0_4 = arith.constant 0 : index
    %1 = vector.load %arg2[%c0_2, %c0_3, %c0_4] : memref<8x16x32xbf16, #tpu.memory_space<vmem>>, vector<8x16x32xbf16>
    "tpu.trace_start"() <{level = 10 : i32, message = "ibk,ikj->ibj"}> : () -> ()
    %cst = arith.constant dense<0.000000e+00> : vector<8x8x32xf32>
    %2 = tpu.matmul %0, %1, %cst {dimension_numbers = #tpu.dot_dimension_numbers<[2], [1], [1], [2], [0, 0, 0, 1, 1, 2], [0], [0]>} : vector<8x8x16xbf16>, vector<8x16x32xbf16>, vector<8x8x32xf32> -> vector<8x8x32xf32>
    "tpu.trace_stop"() : () -> ()
    %3 = tpu.iota {dimensions = array<i32: 0>} : vector<4x32xi32>
    %4 = tpu.iota {dimensions = array<i32: 1>} : vector<4x32xi32>
    %c8_i32 = arith.constant 8 : i32
    %5 = vector.broadcast %c8_i32 : i32 to vector<4x32xi32>
    %6 = arith.muli %3, %5 : vector<4x32xi32>
    %7 = arith.cmpi sge, %4, %6 : vector<4x32xi32>
    %c1_i32 = arith.constant 1 : i32
    %8 = vector.broadcast %c1_i32 : i32 to vector<4x32xi32>
    %9 = arith.addi %3, %8 : vector<4x32xi32>
    %c8_i32_5 = arith.constant 8 : i32
    %10 = vector.broadcast %c8_i32_5 : i32 to vector<4x32xi32>
    %11 = arith.muli %9, %10 : vector<4x32xi32>
    %12 = arith.cmpi slt, %4, %11 : vector<4x32xi32>
    %13 = arith.andi %7, %12 : vector<4x32xi1>
    %14 = arith.extui %13 : vector<4x32xi1> to vector<4x32xi32>
    %15 = arith.sitofp %14 : vector<4x32xi32> to vector<4x32xf32>
    %16 = tpu.iota {dimensions = array<i32: 0>} : vector<32x4xi32>
    %17 = tpu.iota {dimensions = array<i32: 1>} : vector<32x4xi32>
    %c8_i32_6 = arith.constant 8 : i32
    %18 = vector.broadcast %c8_i32_6 : i32 to vector<32x4xi32>
    %19 = arith.muli %17, %18 : vector<32x4xi32>
    %20 = arith.cmpi sge, %16, %19 : vector<32x4xi32>
    %c1_i32_7 = arith.constant 1 : i32
    %21 = vector.broadcast %c1_i32_7 : i32 to vector<32x4xi32>
    %22 = arith.addi %17, %21 : vector<32x4xi32>
    %c8_i32_8 = arith.constant 8 : i32
    %23 = vector.broadcast %c8_i32_8 : i32 to vector<32x4xi32>
    %24 = arith.muli %22, %23 : vector<32x4xi32>
    %25 = arith.cmpi slt, %16, %24 : vector<32x4xi32>
    %26 = arith.andi %20, %25 : vector<32x4xi1>
    %27 = arith.extui %26 : vector<32x4xi1> to vector<32x4xi32>
    %28 = arith.sitofp %27 : vector<32x4xi32> to vector<32x4xf32>
    %c0_9 = arith.constant 0 : index
    %c0_10 = arith.constant 0 : index
    %29 = vector.load %arg3[%c0_9, %c0_10] : memref<8x4xf32, #tpu.memory_space<vmem>>, vector<8x4xf32>
    %30 = vector.shape_cast %29 : vector<8x4xf32> to vector<8x1x4xf32>
    %31 = vector.shape_cast %30 : vector<8x1x4xf32> to vector<8x1x4xf32>
    %32 = vector.broadcast %31 : vector<8x1x4xf32> to vector<8x8x4xf32>
    %cst_11 = arith.constant dense<0xFF800000> : vector<8x8xf32>
    %33 = vector.multi_reduction <maximumf>, %32, %cst_11 [2] : vector<8x8x4xf32> to vector<8x8xf32>
    %34 = vector.shape_cast %33 : vector<8x8xf32> to vector<8x8x1xf32>
    %35 = vector.broadcast %34 : vector<8x8x1xf32> to vector<8x8x4xf32>
    %36 = arith.subf %32, %35 : vector<8x8x4xf32>
    %37 = math.exp %36 : vector<8x8x4xf32>
    %cst_12 = arith.constant dense<0.000000e+00> : vector<8x8xf32>
    %38 = vector.multi_reduction <add>, %37, %cst_12 [2] : vector<8x8x4xf32> to vector<8x8xf32>
    %39 = vector.shape_cast %38 : vector<8x8xf32> to vector<8x8x1xf32>
    %40 = tpu.reciprocal %39 {approx = true} : vector<8x8x1xf32> -> vector<8x8x1xf32>
    %41 = vector.broadcast %40 : vector<8x8x1xf32> to vector<8x8x4xf32>
    %42 = arith.mulf %37, %41 : vector<8x8x4xf32>
    %43 = vector.shape_cast %42 : vector<8x8x4xf32> to vector<64x4xf32>
    %cst_13 = arith.constant dense<0.000000e+00> : vector<64x32xf32>
    %44 = tpu.matmul %43, %15, %cst_13 {dimension_numbers = #tpu.dot_dimension_numbers<[1], [0], [0], [1], [0, 0, 1, 1], [], []>} : vector<64x4xf32>, vector<4x32xf32>, vector<64x32xf32> -> vector<64x32xf32>
    %45 = vector.shape_cast %44 : vector<64x32xf32> to vector<8x8x32xf32>
    %46 = arith.mulf %45, %2 : vector<8x8x32xf32>
    %cst_14 = arith.constant dense<0.000000e+00> : vector<8x32xf32>
    %47 = vector.multi_reduction <add>, %46, %cst_14 [0] : vector<8x8x32xf32> to vector<8x32xf32>
    %48 = arith.mulf %47, %47 : vector<8x32xf32>
    %cst_15 = arith.constant dense<0.000000e+00> : vector<8x4xf32>
    %49 = tpu.matmul %48, %28, %cst_15 {dimension_numbers = #tpu.dot_dimension_numbers<[1], [0], [0], [1], [0, 0, 1, 1], [], []>} : vector<8x32xf32>, vector<32x4xf32>, vector<8x4xf32> -> vector<8x4xf32>
    %cst_16 = arith.constant 9.99999996E-13 : f32
    %50 = vector.broadcast %cst_16 : f32 to vector<8x4xf32>
    %51 = arith.addf %49, %50 : vector<8x4xf32>
    %52 = math.rsqrt %51 : vector<8x4xf32>
    %53 = arith.mulf %49, %52 : vector<8x4xf32>
    %cst_17 = arith.constant 1.000000e+00 : f32
    %54 = vector.broadcast %cst_17 : f32 to vector<8x4xf32>
    %55 = arith.addf %54, %49 : vector<8x4xf32>
    %56 = tpu.reciprocal %55 {approx = true} : vector<8x4xf32> -> vector<8x4xf32>
    %57 = arith.mulf %53, %56 : vector<8x4xf32>
    %cst_18 = arith.constant dense<0.000000e+00> : vector<8x32xf32>
    %58 = tpu.matmul %57, %15, %cst_18 {dimension_numbers = #tpu.dot_dimension_numbers<[1], [0], [0], [1], [0, 0, 1, 1], [], []>} : vector<8x4xf32>, vector<4x32xf32>, vector<8x32xf32> -> vector<8x32xf32>
    %59 = arith.mulf %47, %58 : vector<8x32xf32>
    %c0_i32 = arith.constant 0 : i32
    %60 = vector.shape_cast %59 : vector<8x32xf32> to vector<1x8x32xf32>
    %61 = vector.broadcast %60 : vector<1x8x32xf32> to vector<8x8x32xf32>
    %62 = arith.mulf %2, %61 : vector<8x8x32xf32>
    %63 = vector.shape_cast %62 : vector<8x8x32xf32> to vector<64x32xf32>
    %cst_19 = arith.constant dense<0.000000e+00> : vector<64x4xf32>
    %64 = tpu.matmul %63, %28, %cst_19 {dimension_numbers = #tpu.dot_dimension_numbers<[1], [0], [0], [1], [0, 0, 1, 1], [], []>} : vector<64x32xf32>, vector<32x4xf32>, vector<64x4xf32> -> vector<64x4xf32>
    %65 = vector.shape_cast %64 : vector<64x4xf32> to vector<8x8x4xf32>
    %66 = arith.addf %32, %65 : vector<8x8x4xf32>
    %cst_20 = arith.constant dense<0xFF800000> : vector<8x8xf32>
    %67 = vector.multi_reduction <maximumf>, %66, %cst_20 [2] : vector<8x8x4xf32> to vector<8x8xf32>
    %68 = vector.shape_cast %67 : vector<8x8xf32> to vector<8x8x1xf32>
    %69 = vector.broadcast %68 : vector<8x8x1xf32> to vector<8x8x4xf32>
    %70 = arith.subf %66, %69 : vector<8x8x4xf32>
    %71 = math.exp %70 : vector<8x8x4xf32>
    %cst_21 = arith.constant dense<0.000000e+00> : vector<8x8xf32>
    %72 = vector.multi_reduction <add>, %71, %cst_21 [2] : vector<8x8x4xf32> to vector<8x8xf32>
    %73 = vector.shape_cast %72 : vector<8x8xf32> to vector<8x8x1xf32>
    %74 = tpu.reciprocal %73 {approx = true} : vector<8x8x1xf32> -> vector<8x8x1xf32>
    %75 = vector.broadcast %74 : vector<8x8x1xf32> to vector<8x8x4xf32>
    %76 = arith.mulf %71, %75 : vector<8x8x4xf32>
    %77 = vector.shape_cast %76 : vector<8x8x4xf32> to vector<64x4xf32>
    %cst_22 = arith.constant dense<0.000000e+00> : vector<64x32xf32>
    %78 = tpu.matmul %77, %15, %cst_22 {dimension_numbers = #tpu.dot_dimension_numbers<[1], [0], [0], [1], [0, 0, 1, 1], [], []>} : vector<64x4xf32>, vector<4x32xf32>, vector<64x32xf32> -> vector<64x32xf32>
    %79 = vector.shape_cast %78 : vector<64x32xf32> to vector<8x8x32xf32>
    %80 = arith.mulf %79, %2 : vector<8x8x32xf32>
    %cst_23 = arith.constant dense<0.000000e+00> : vector<8x32xf32>
    %81 = vector.multi_reduction <add>, %80, %cst_23 [0] : vector<8x8x32xf32> to vector<8x32xf32>
    %82 = arith.mulf %81, %81 : vector<8x32xf32>
    %cst_24 = arith.constant dense<0.000000e+00> : vector<8x4xf32>
    %83 = tpu.matmul %82, %28, %cst_24 {dimension_numbers = #tpu.dot_dimension_numbers<[1], [0], [0], [1], [0, 0, 1, 1], [], []>} : vector<8x32xf32>, vector<32x4xf32>, vector<8x4xf32> -> vector<8x4xf32>
    %cst_25 = arith.constant 9.99999996E-13 : f32
    %84 = vector.broadcast %cst_25 : f32 to vector<8x4xf32>
    %85 = arith.addf %83, %84 : vector<8x4xf32>
    %86 = math.rsqrt %85 : vector<8x4xf32>
    %87 = arith.mulf %83, %86 : vector<8x4xf32>
    %cst_26 = arith.constant 1.000000e+00 : f32
    %88 = vector.broadcast %cst_26 : f32 to vector<8x4xf32>
    %89 = arith.addf %88, %83 : vector<8x4xf32>
    %90 = tpu.reciprocal %89 {approx = true} : vector<8x4xf32> -> vector<8x4xf32>
    %91 = arith.mulf %87, %90 : vector<8x4xf32>
    %cst_27 = arith.constant dense<0.000000e+00> : vector<8x32xf32>
    %92 = tpu.matmul %91, %15, %cst_27 {dimension_numbers = #tpu.dot_dimension_numbers<[1], [0], [0], [1], [0, 0, 1, 1], [], []>} : vector<8x4xf32>, vector<4x32xf32>, vector<8x32xf32> -> vector<8x32xf32>
    %93 = arith.mulf %81, %92 : vector<8x32xf32>
    %c1_i32_28 = arith.constant 1 : i32
    %94 = vector.shape_cast %93 : vector<8x32xf32> to vector<1x8x32xf32>
    %95 = vector.broadcast %94 : vector<1x8x32xf32> to vector<8x8x32xf32>
    %96 = arith.mulf %2, %95 : vector<8x8x32xf32>
    %97 = vector.shape_cast %96 : vector<8x8x32xf32> to vector<64x32xf32>
    %cst_29 = arith.constant dense<0.000000e+00> : vector<64x4xf32>
    %98 = tpu.matmul %97, %28, %cst_29 {dimension_numbers = #tpu.dot_dimension_numbers<[1], [0], [0], [1], [0, 0, 1, 1], [], []>} : vector<64x32xf32>, vector<32x4xf32>, vector<64x4xf32> -> vector<64x4xf32>
    %99 = vector.shape_cast %98 : vector<64x4xf32> to vector<8x8x4xf32>
    %100 = arith.addf %66, %99 : vector<8x8x4xf32>
    %cst_30 = arith.constant dense<0xFF800000> : vector<8x8xf32>
    %101 = vector.multi_reduction <maximumf>, %100, %cst_30 [2] : vector<8x8x4xf32> to vector<8x8xf32>
    %102 = vector.shape_cast %101 : vector<8x8xf32> to vector<8x8x1xf32>
    %103 = vector.broadcast %102 : vector<8x8x1xf32> to vector<8x8x4xf32>
    %104 = arith.subf %100, %103 : vector<8x8x4xf32>
    %105 = math.exp %104 : vector<8x8x4xf32>
    %cst_31 = arith.constant dense<0.000000e+00> : vector<8x8xf32>
    %106 = vector.multi_reduction <add>, %105, %cst_31 [2] : vector<8x8x4xf32> to vector<8x8xf32>
    %107 = vector.shape_cast %106 : vector<8x8xf32> to vector<8x8x1xf32>
    %108 = tpu.reciprocal %107 {approx = true} : vector<8x8x1xf32> -> vector<8x8x1xf32>
    %109 = vector.broadcast %108 : vector<8x8x1xf32> to vector<8x8x4xf32>
    %110 = arith.mulf %105, %109 : vector<8x8x4xf32>
    %111 = vector.shape_cast %110 : vector<8x8x4xf32> to vector<64x4xf32>
    %cst_32 = arith.constant dense<0.000000e+00> : vector<64x32xf32>
    %112 = tpu.matmul %111, %15, %cst_32 {dimension_numbers = #tpu.dot_dimension_numbers<[1], [0], [0], [1], [0, 0, 1, 1], [], []>} : vector<64x4xf32>, vector<4x32xf32>, vector<64x32xf32> -> vector<64x32xf32>
    %113 = vector.shape_cast %112 : vector<64x32xf32> to vector<8x8x32xf32>
    %114 = arith.mulf %113, %2 : vector<8x8x32xf32>
    %cst_33 = arith.constant dense<0.000000e+00> : vector<8x32xf32>
    %115 = vector.multi_reduction <add>, %114, %cst_33 [0] : vector<8x8x32xf32> to vector<8x32xf32>
    %116 = arith.mulf %115, %115 : vector<8x32xf32>
    %cst_34 = arith.constant dense<0.000000e+00> : vector<8x4xf32>
    %117 = tpu.matmul %116, %28, %cst_34 {dimension_numbers = #tpu.dot_dimension_numbers<[1], [0], [0], [1], [0, 0, 1, 1], [], []>} : vector<8x32xf32>, vector<32x4xf32>, vector<8x4xf32> -> vector<8x4xf32>
    %cst_35 = arith.constant 9.99999996E-13 : f32
    %118 = vector.broadcast %cst_35 : f32 to vector<8x4xf32>
    %119 = arith.addf %117, %118 : vector<8x4xf32>
    %120 = math.rsqrt %119 : vector<8x4xf32>
    %121 = arith.mulf %117, %120 : vector<8x4xf32>
    %cst_36 = arith.constant 1.000000e+00 : f32
    %122 = vector.broadcast %cst_36 : f32 to vector<8x4xf32>
    %123 = arith.addf %122, %117 : vector<8x4xf32>
    %124 = tpu.reciprocal %123 {approx = true} : vector<8x4xf32> -> vector<8x4xf32>
    %125 = arith.mulf %121, %124 : vector<8x4xf32>
    %cst_37 = arith.constant dense<0.000000e+00> : vector<8x32xf32>
    %126 = tpu.matmul %125, %15, %cst_37 {dimension_numbers = #tpu.dot_dimension_numbers<[1], [0], [0], [1], [0, 0, 1, 1], [], []>} : vector<8x4xf32>, vector<4x32xf32>, vector<8x32xf32> -> vector<8x32xf32>
    %127 = arith.mulf %115, %126 : vector<8x32xf32>
    %c2_i32 = arith.constant 2 : i32
    %128 = vector.shape_cast %127 : vector<8x32xf32> to vector<1x8x32xf32>
    %129 = vector.broadcast %128 : vector<1x8x32xf32> to vector<8x8x32xf32>
    %130 = arith.mulf %2, %129 : vector<8x8x32xf32>
    %131 = vector.shape_cast %130 : vector<8x8x32xf32> to vector<64x32xf32>
    %cst_38 = arith.constant dense<0.000000e+00> : vector<64x4xf32>
    %132 = tpu.matmul %131, %28, %cst_38 {dimension_numbers = #tpu.dot_dimension_numbers<[1], [0], [0], [1], [0, 0, 1, 1], [], []>} : vector<64x32xf32>, vector<32x4xf32>, vector<64x4xf32> -> vector<64x4xf32>
    %133 = vector.shape_cast %132 : vector<64x4xf32> to vector<8x8x4xf32>
    %134 = arith.addf %100, %133 : vector<8x8x4xf32>
    %cst_39 = arith.constant dense<0xFF800000> : vector<8x8xf32>
    %135 = vector.multi_reduction <maximumf>, %134, %cst_39 [2] : vector<8x8x4xf32> to vector<8x8xf32>
    %136 = vector.shape_cast %135 : vector<8x8xf32> to vector<8x8x1xf32>
    %137 = vector.broadcast %136 : vector<8x8x1xf32> to vector<8x8x4xf32>
    %138 = arith.subf %134, %137 : vector<8x8x4xf32>
    %139 = math.exp %138 : vector<8x8x4xf32>
    %cst_40 = arith.constant dense<0.000000e+00> : vector<8x8xf32>
    %140 = vector.multi_reduction <add>, %139, %cst_40 [2] : vector<8x8x4xf32> to vector<8x8xf32>
    %141 = vector.shape_cast %140 : vector<8x8xf32> to vector<8x8x1xf32>
    %142 = tpu.reciprocal %141 {approx = true} : vector<8x8x1xf32> -> vector<8x8x1xf32>
    %143 = vector.broadcast %142 : vector<8x8x1xf32> to vector<8x8x4xf32>
    %144 = arith.mulf %139, %143 : vector<8x8x4xf32>
    %145 = vector.shape_cast %144 : vector<8x8x4xf32> to vector<64x4xf32>
    %cst_41 = arith.constant dense<0.000000e+00> : vector<64x32xf32>
    %146 = tpu.matmul %145, %15, %cst_41 {dimension_numbers = #tpu.dot_dimension_numbers<[1], [0], [0], [1], [0, 0, 1, 1], [], []>} : vector<64x4xf32>, vector<4x32xf32>, vector<64x32xf32> -> vector<64x32xf32>
    %147 = vector.shape_cast %146 : vector<64x32xf32> to vector<8x8x32xf32>
    %148 = arith.mulf %147, %2 : vector<8x8x32xf32>
    %cst_42 = arith.constant dense<0.000000e+00> : vector<8x32xf32>
    %149 = vector.multi_reduction <add>, %148, %cst_42 [0] : vector<8x8x32xf32> to vector<8x32xf32>
    %150 = arith.mulf %149, %149 : vector<8x32xf32>
    %cst_43 = arith.constant dense<0.000000e+00> : vector<8x4xf32>
    %151 = tpu.matmul %150, %28, %cst_43 {dimension_numbers = #tpu.dot_dimension_numbers<[1], [0], [0], [1], [0, 0, 1, 1], [], []>} : vector<8x32xf32>, vector<32x4xf32>, vector<8x4xf32> -> vector<8x4xf32>
    %cst_44 = arith.constant 9.99999996E-13 : f32
    %152 = vector.broadcast %cst_44 : f32 to vector<8x4xf32>
    %153 = arith.addf %151, %152 : vector<8x4xf32>
    %154 = math.rsqrt %153 : vector<8x4xf32>
    %155 = arith.mulf %151, %154 : vector<8x4xf32>
    %cst_45 = arith.constant 1.000000e+00 : f32
    %156 = vector.broadcast %cst_45 : f32 to vector<8x4xf32>
    %157 = arith.addf %156, %151 : vector<8x4xf32>
    %158 = tpu.reciprocal %157 {approx = true} : vector<8x4xf32> -> vector<8x4xf32>
    %159 = arith.mulf %155, %158 : vector<8x4xf32>
    %cst_46 = arith.constant dense<0.000000e+00> : vector<8x32xf32>
    %160 = tpu.matmul %159, %15, %cst_46 {dimension_numbers = #tpu.dot_dimension_numbers<[1], [0], [0], [1], [0, 0, 1, 1], [], []>} : vector<8x4xf32>, vector<4x32xf32>, vector<8x32xf32> -> vector<8x32xf32>
    %161 = arith.mulf %149, %160 : vector<8x32xf32>
    %cst_47 = arith.constant 0.000000e+00 : f32
    %162 = vector.broadcast %cst_47 : f32 to vector<8x96xf32>
    %163 = tpu.concatenate %161, %162 in 1 : vector<8x32xf32>, vector<8x96xf32> -> vector<8x128xf32>
    %c0_48 = arith.constant 0 : index
    %c0_49 = arith.constant 0 : index
    %164 = vector.load %arg4[%c0_48, %c0_49] : memref<8x128xf32, #tpu.memory_space<vmem>>, vector<8x128xf32>
    tpu.vector_store %arg4[%c0_48, %c0_49], %163 {strides = array<i32>} : memref<8x128xf32, #tpu.memory_space<vmem>>, vector<8x128xf32>,
    return
  }
  func.func @transform_0(%arg0: i32) -> (i32, i32, i32) {
    %c0_i32 = arith.constant 0 : i32
    %c0_i32_0 = arith.constant 0 : i32
    %c0_i32_1 = arith.constant 0 : i32
    return %c0_i32, %arg0, %c0_i32_0 : i32, i32, i32
  }
  func.func @transform_1(%arg0: i32) -> (i32, i32, i32) {
    %c0_i32 = arith.constant 0 : i32
    %c0_i32_0 = arith.constant 0 : i32
    %c0_i32_1 = arith.constant 0 : i32
    %c0_i32_2 = arith.constant 0 : i32
    return %c0_i32, %c0_i32_0, %c0_i32_1 : i32, i32, i32
  }
  func.func @transform_2(%arg0: i32) -> (i32, i32) {
    %c0_i32 = arith.constant 0 : i32
    %c0_i32_0 = arith.constant 0 : i32
    %c0_i32_1 = arith.constant 0 : i32
    return %c0_i32, %c0_i32_0 : i32, i32
  }
  func.func @transform_3(%arg0: i32) -> (i32, i32) {
    %c0_i32 = arith.constant 0 : i32
    %c0_i32_0 = arith.constant 0 : i32
    return %arg0, %c0_i32 : i32, i32
  }
}

</mosaic_0001>

<llo_original>
// kernel: tpu_custom_call.1
$region0: #{tpu_custom_call.1}
  #allocation0 [shape = 'u32[]', space=smem, size = 0x4, offset = 0x4, fixed_abs, tag = 'smem constant byte address 0x4 - core index']
  #allocation1 [shape = 'u32[144,128]{1,0:T(1,128)}', space=vmem, size = 0x12000, scoped, tag = 'internal scratch']
  %s0 = inlined_call_operand.hbm [shape: bf16[8,8,16], index: 0, kind: input, shape index: {}]
  %s1 = inlined_call_operand.hbm [shape: bf16[8,16,32], index: 1, kind: input, shape index: {}]
  %s2 = inlined_call_operand.vmem [shape: f32[8,4], index: 2, kind: input, shape index: {}]
  %s3 = inlined_call_operand.hbm [shape: f32[8,128], index: 3, kind: output, shape index: {}]
  %s4 = sld [smem:[#allocation0]]
  $region30: #{tpu_custom_call.1} parent=0
    _
  %s6 = ssub.s32 1, %s4
  %s7 = scalar_select 0, %s6, %s4
  $region1: #{tpu_custom_call.1} parent=0
    #allocation2 [shape = 'u8[16384]{0}', space=vmem, size = 0x4000, scoped, tag = 'input window, operand 0, single buffered']
    #allocation3 [shape = 's32[1]{0}', space=sflag, size = 0x4, scoped, tag = 'scoped memory for tpu_custom_call.1']
    #allocation4 [shape = 's32[1]{0}', space=sflag, size = 0x4, scoped, tag = 'scoped memory for tpu_custom_call.1']
    #allocation5 [shape = 'u8[32768]{0}', space=vmem, size = 0x8000, scoped, tag = 'input window, operand 1, single buffered']
    #allocation6 [shape = 's32[1]{0}', space=sflag, size = 0x4, scoped, tag = 'scoped memory for tpu_custom_call.1']
    #allocation7 [shape = 'u8[4096]{0}', space=vmem, size = 0x1000, scoped, tag = 'output window, operand 0, single buffered']
    %8 = vsyncpa [#allocation3], 0
    %9 = vsyncpa [#allocation6], 0
    %10 = vsyncpa [#allocation4], 0
    // Predicated region
    $region2: #{tpu_custom_call.1} parent=1 // pred_check
      _
    $region3: #{tpu_custom_call.1} parent=1 // pred_check_branch
      %12 = sbr.rel (0) target = $region5
    $region4: #{tpu_custom_call.1} parent=1 // pred_region
      %s14 = ssub.s32 512, 512
      %15 = vsyncadd [#allocation3], %s14
      %s16 = sshll.u32 [#allocation2], 4
      %s17 = int_to_ptr.vmem [resolvable:$true] %s16
      %22 = dma.hbm_to_vmem [thread:$0]  %s0, 512, %s17, [#allocation3], 64, 64, 4
    $region5: #{tpu_custom_call.1} parent=1 // pred_fallthru
      _
    // Predicated region
    $region6: #{tpu_custom_call.1} parent=1 // pred_check
      _
    $region7: #{tpu_custom_call.1} parent=1 // pred_check_branch
      %24 = sbr.rel (0) target = $region9
    $region8: #{tpu_custom_call.1} parent=1 // pred_region
      %s26 = ssub.s32 1024, 1024
      %27 = vsyncadd [#allocation6], %s26
      %s28 = sshll.u32 [#allocation5], 4
      %s29 = int_to_ptr.vmem [resolvable:$true] %s28
      %34 = dma.hbm_to_vmem [thread:$0]  %s1, 1024, %s29, [#allocation6], 64, 64, 4
    $region9: #{tpu_custom_call.1} parent=1 // pred_fallthru
      _
    // Predicated region
    $region10: #{tpu_custom_call.1} parent=1 // pred_check
      _
    $region11: #{tpu_custom_call.1} parent=1 // pred_check_branch
      %36 = sbr.rel (0) target = $region13
    $region12: #{tpu_custom_call.1} parent=1 // pred_region
      _
    $region13: #{tpu_custom_call.1} parent=1 // pred_fallthru
      _
    // Predicated region
    $region14: #{tpu_custom_call.1} parent=1 // pred_check
      _
    $region15: #{tpu_custom_call.1} parent=1 // pred_check_branch
      %38 = sbr.rel (0) target = $region17
    $region16: #{tpu_custom_call.1} parent=1 // pred_region
      %39 = dma.done [#allocation3], 512
    $region17: #{tpu_custom_call.1} parent=1 // pred_fallthru
      _
    // Predicated region
    $region18: #{tpu_custom_call.1} parent=1 // pred_check
      _
    $region19: #{tpu_custom_call.1} parent=1 // pred_check_branch
      %41 = sbr.rel (0) target = $region21
    $region20: #{tpu_custom_call.1} parent=1 // pred_region
      %42 = dma.done [#allocation6], 1024
    $region21: #{tpu_custom_call.1} parent=1 // pred_fallthru
      _
    %v44 = vld [vmem:[#allocation2] sm:$0xf]
    %v45 = vld [vmem:[#allocation2 + $0x4] sm:$0xf]
    %v46 = vld [vmem:[#allocation2 + $0x8] sm:$0xf]
    %v47 = vld [vmem:[#allocation2 + $0xc] sm:$0xf]
    %v48 = vld [vmem:[#allocation2 + $0x10] sm:$0xf]
    %v49 = vld [vmem:[#allocation2 + $0x14] sm:$0xf]
    %v50 = vld [vmem:[#allocation2 + $0x18] sm:$0xf]
    %v51 = vld [vmem:[#allocation2 + $0x1c] sm:$0xf]
    %v52 = vld [vmem:[#allocation5] sm:$0xf]
    %v53 = vld [vmem:[#allocation5 + $0x4] sm:$0xf]
    %v54 = vld [vmem:[#allocation5 + $0x8] sm:$0xf]
    %v55 = vld [vmem:[#allocation5 + $0xc] sm:$0xf]
    %v56 = vld [vmem:[#allocation5 + $0x10] sm:$0xf]
    %v57 = vld [vmem:[#allocation5 + $0x14] sm:$0xf]
    %v58 = vld [vmem:[#allocation5 + $0x18] sm:$0xf]
    %v59 = vld [vmem:[#allocation5 + $0x1c] sm:$0xf]
    %v60 = vld [vmem:[#allocation5 + $0x20] sm:$0xf]
    %v61 = vld [vmem:[#allocation5 + $0x24] sm:$0xf]
    %v62 = vld [vmem:[#allocation5 + $0x28] sm:$0xf]
    %v63 = vld [vmem:[#allocation5 + $0x2c] sm:$0xf]
    %v64 = vld [vmem:[#allocation5 + $0x30] sm:$0xf]
    %v65 = vld [vmem:[#allocation5 + $0x34] sm:$0xf]
    %v66 = vld [vmem:[#allocation5 + $0x38] sm:$0xf]
    %v67 = vld [vmem:[#allocation5 + $0x3c] sm:$0xf]
    %v70 = vunpack.c.l.b16 %v52
    %v71 = vunpack.c.l.b16 %v53
    %v72 = vpack.c.b16 %v71, %v70
    %vm74 = vcmask 130048
    %v76 = vsel %vm74, %v44, 0
    %78 = vmatprep.subr.bf16.mxu0 0
    %79 = vmatpush1.bf16.msra.mxu0 %v72
    %80 = vmatprep.subr.bf16.mxu0 0
    %81 = vmatpush1.bf16.msra.mxu0 0
    %82 = vmatprep.subr.bf16.mxu0 0
    %83 = vmatpush1.bf16.msra.mxu0 0
    %84 = vmatprep.subr.bf16.mxu0 0
    %85 = vmatpush1.bf16.msra.mxu0 0
    %86 = vmatprep.subr.bf16.mxu0 0
    %87 = vmatpush1.bf16.msra.mxu0 0
    %88 = vmatprep.subr.bf16.mxu0 0
    %89 = vmatpush1.bf16.msra.mxu0 0
    %90 = vmatprep.subr.bf16.mxu0 0
    %91 = vmatpush1.bf16.msra.mxu0 0
    %92 = vmatprep.subr.bf16.mxu0 0
    %93 = vmatpush1.bf16.msra.mxu0 0
    %94 = vmatprep.subr.bf16.mxu0 0
    %95 = vmatpush1.bf16.msra.mxu0 0
    %96 = vmatprep.subr.bf16.mxu0 0
    %97 = vmatpush1.bf16.msra.mxu0 0
    %98 = vmatprep.subr.bf16.mxu0 0
    %99 = vmatpush1.bf16.msra.mxu0 0
    %100 = vmatprep.subr.bf16.mxu0 0
    %101 = vmatpush1.bf16.msra.mxu0 0
    %102 = vmatprep.subr.bf16.mxu0 0
    %103 = vmatpush1.bf16.msra.mxu0 0
    %104 = vmatprep.subr.bf16.mxu0 0
    %105 = vmatpush1.bf16.msra.mxu0 0
    %106 = vmatprep.subr.bf16.mxu0 0
    %107 = vmatpush1.bf16.msra.mxu0 0
    %108 = vmatprep.subr.bf16.mxu0 0
    %109 = vmatpush1.bf16.msra.mxu0 0
    %110 = vmatprep.mubr.bf16.mxu0 0
    %111 = vmatmul.mubr.bf16.gmra.mrb[0].mxu0 %v76
    %v112 = vpop.f32.mrb[0].mxu0
    %v113 = vadd.f32 0.0, %v112
    %v114 = vpop.f32.mrb[0].mxu0
    %v115 = vpop.f32.mrb[0].mxu0
    %v116 = vpop.f32.mrb[0].mxu0
    %117 = vdwg.mxu0
    %v120 = vunpack.c.l.b16 %v54
    %v121 = vunpack.c.l.b16 %v55
    %v122 = vpack.c.b16 %v121, %v120
    %v125 = vsel %vm74, %v45, 0
    %127 = vmatprep.subr.bf16.mxu0 0
    %128 = vmatpush1.bf16.msra.mxu0 %v122
    %129 = vmatprep.subr.bf16.mxu0 0
    %130 = vmatpush1.bf16.msra.mxu0 0
    %131 = vmatprep.subr.bf16.mxu0 0
    %132 = vmatpush1.bf16.msra.mxu0 0
    %133 = vmatprep.subr.bf16.mxu0 0
    %134 = vmatpush1.bf16.msra.mxu0 0
    %135 = vmatprep.subr.bf16.mxu0 0
    %136 = vmatpush1.bf16.msra.mxu0 0
    %137 = vmatprep.subr.bf16.mxu0 0
    %138 = vmatpush1.bf16.msra.mxu0 0
    %139 = vmatprep.subr.bf16.mxu0 0
    %140 = vmatpush1.bf16.msra.mxu0 0
    %141 = vmatprep.subr.bf16.mxu0 0
    %142 = vmatpush1.bf16.msra.mxu0 0
    %143 = vmatprep.subr.bf16.mxu0 0
    %144 = vmatpush1.bf16.msra.mxu0 0
    %145 = vmatprep.subr.bf16.mxu0 0
    %146 = vmatpush1.bf16.msra.mxu0 0
    %147 = vmatprep.subr.bf16.mxu0 0
    %148 = vmatpush1.bf16.msra.mxu0 0
    %149 = vmatprep.subr.bf16.mxu0 0
    %150 = vmatpush1.bf16.msra.mxu0 0
    %151 = vmatprep.subr.bf16.mxu0 0
    %152 = vmatpush1.bf16.msra.mxu0 0
    %153 = vmatprep.subr.bf16.mxu0 0
    %154 = vmatpush1.bf16.msra.mxu0 0
    %155 = vmatprep.subr.bf16.mxu0 0
    %156 = vmatpush1.bf16.msra.mxu0 0
    %157 = vmatprep.subr.bf16.mxu0 0
    %158 = vmatpush1.bf16.msra.mxu0 0
    %159 = vmatprep.mubr.bf16.mxu0 0
    %160 = vmatmul.mubr.bf16.gmra.mrb[0].mxu0 %v125
    %v161 = vpop.f32.mrb[0].mxu0
    %v162 = vadd.f32 0.0, %v161
    %v163 = vpop.f32.mrb[0].mxu0
    %v164 = vpop.f32.mrb[0].mxu0
    %v165 = vpop.f32.mrb[0].mxu0
    %166 = vdwg.mxu0
    %v169 = vunpack.c.l.b16 %v56
    %v170 = vunpack.c.l.b16 %v57
    %v171 = vpack.c.b16 %v170, %v169
    %v174 = vsel %vm74, %v46, 0
    %176 = vmatprep.subr.bf16.mxu0 0
    %177 = vmatpush1.bf16.msra.mxu0 %v171
    %178 = vmatprep.subr.bf16.mxu0 0
    %179 = vmatpush1.bf16.msra.mxu0 0
    %180 = vmatprep.subr.bf16.mxu0 0
    %181 = vmatpush1.bf16.msra.mxu0 0
    %182 = vmatprep.subr.bf16.mxu0 0
    %183 = vmatpush1.bf16.msra.mxu0 0
    %184 = vmatprep.subr.bf16.mxu0 0
    %185 = vmatpush1.bf16.msra.mxu0 0
    %186 = vmatprep.subr.bf16.mxu0 0
    %187 = vmatpush1.bf16.msra.mxu0 0
    %188 = vmatprep.subr.bf16.mxu0 0
    %189 = vmatpush1.bf16.msra.mxu0 0
    %190 = vmatprep.subr.bf16.mxu0 0
    %191 = vmatpush1.bf16.msra.mxu0 0
    %192 = vmatprep.subr.bf16.mxu0 0
    %193 = vmatpush1.bf16.msra.mxu0 0
    %194 = vmatprep.subr.bf16.mxu0 0
    %195 = vmatpush1.bf16.msra.mxu0 0
    %196 = vmatprep.subr.bf16.mxu0 0
    %197 = vmatpush1.bf16.msra.mxu0 0
    %198 = vmatprep.subr.bf16.mxu0 0
    %199 = vmatpush1.bf16.msra.mxu0 0
    %200 = vmatprep.subr.bf16.mxu0 0
    %201 = vmatpush1.bf16.msra.mxu0 0
    %202 = vmatprep.subr.bf16.mxu0 0
    %203 = vmatpush1.bf16.msra.mxu0 0
    %204 = vmatprep.subr.bf16.mxu0 0
    %205 = vmatpush1.bf16.msra.mxu0 0
    %206 = vmatprep.subr.bf16.mxu0 0
    %207 = vmatpush1.bf16.msra.mxu0 0
    %208 = vmatprep.mubr.bf16.mxu0 0
    %209 = vmatmul.mubr.bf16.gmra.mrb[0].mxu0 %v174
    %v210 = vpop.f32.mrb[0].mxu0
    %v211 = vadd.f32 0.0, %v210
    %v212 = vpop.f32.mrb[0].mxu0
    %v213 = vpop.f32.mrb[0].mxu0
    %v214 = vpop.f32.mrb[0].mxu0
    %215 = vdwg.mxu0
    %v218 = vunpack.c.l.b16 %v58
    %v219 = vunpack.c.l.b16 %v59
    %v220 = vpack.c.b16 %v219, %v218
    %v223 = vsel %vm74, %v47, 0
    %225 = vmatprep.subr.bf16.mxu0 0
    %226 = vmatpush1.bf16.msra.mxu0 %v220
    %227 = vmatprep.subr.bf16.mxu0 0
    %228 = vmatpush1.bf16.msra.mxu0 0
    %229 = vmatprep.subr.bf16.mxu0 0
    %230 = vmatpush1.bf16.msra.mxu0 0
    %231 = vmatprep.subr.bf16.mxu0 0
    %232 = vmatpush1.bf16.msra.mxu0 0
    %233 = vmatprep.subr.bf16.mxu0 0
    %234 = vmatpush1.bf16.msra.mxu0 0
    %235 = vmatprep.subr.bf16.mxu0 0
    %236 = vmatpush1.bf16.msra.mxu0 0
    %237 = vmatprep.subr.bf16.mxu0 0
    %238 = vmatpush1.bf16.msra.mxu0 0
    %239 = vmatprep.subr.bf16.mxu0 0
    %240 = vmatpush1.bf16.msra.mxu0 0
    %241 = vmatprep.subr.bf16.mxu0 0
    %242 = vmatpush1.bf16.msra.mxu0 0
    %243 = vmatprep.subr.bf16.mxu0 0
    %244 = vmatpush1.bf16.msra.mxu0 0
    %245 = vmatprep.subr.bf16.mxu0 0
    %246 = vmatpush1.bf16.msra.mxu0 0
    %247 = vmatprep.subr.bf16.mxu0 0
    %248 = vmatpush1.bf16.msra.mxu0 0
    %249 = vmatprep.subr.bf16.mxu0 0
    %250 = vmatpush1.bf16.msra.mxu0 0
    %251 = vmatprep.subr.bf16.mxu0 0
    %252 = vmatpush1.bf16.msra.mxu0 0
    %253 = vmatprep.subr.bf16.mxu0 0
    %254 = vmatpush1.bf16.msra.mxu0 0
    %255 = vmatprep.subr.bf16.mxu0 0
    %256 = vmatpush1.bf16.msra.mxu0 0
    %257 = vmatprep.mubr.bf16.mxu0 0
    %258 = vmatmul.mubr.bf16.gmra.mrb[0].mxu0 %v223
    %v259 = vpop.f32.mrb[0].mxu0
    %v260 = vadd.f32 0.0, %v259
    %v261 = vpop.f32.mrb[0].mxu0
    %v262 = vpop.f32.mrb[0].mxu0
    %v263 = vpop.f32.mrb[0].mxu0
    %264 = vdwg.mxu0
    %v267 = vunpack.c.l.b16 %v60
    %v268 = vunpack.c.l.b16 %v61
    %v269 = vpack.c.b16 %v268, %v267
    %v272 = vsel %vm74, %v48, 0
    %274 = vmatprep.subr.bf16.mxu0 0
    %275 = vmatpush1.bf16.msra.mxu0 %v269
    %276 = vmatprep.subr.bf16.mxu0 0
    %277 = vmatpush1.bf16.msra.mxu0 0
    %278 = vmatprep.subr.bf16.mxu0 0
    %279 = vmatpush1.bf16.msra.mxu0 0
    %280 = vmatprep.subr.bf16.mxu0 0
    %281 = vmatpush1.bf16.msra.mxu0 0
    %282 = vmatprep.subr.bf16.mxu0 0
    %283 = vmatpush1.bf16.msra.mxu0 0
    %284 = vmatprep.subr.bf16.mxu0 0
    %285 = vmatpush1.bf16.msra.mxu0 0
    %286 = vmatprep.subr.bf16.mxu0 0
    %287 = vmatpush1.bf16.msra.mxu0 0
    %288 = vmatprep.subr.bf16.mxu0 0
    %289 = vmatpush1.bf16.msra.mxu0 0
    %290 = vmatprep.subr.bf16.mxu0 0
    %291 = vmatpush1.bf16.msra.mxu0 0
    %292 = vmatprep.subr.bf16.mxu0 0
    %293 = vmatpush1.bf16.msra.mxu0 0
    %294 = vmatprep.subr.bf16.mxu0 0
    %295 = vmatpush1.bf16.msra.mxu0 0
    %296 = vmatprep.subr.bf16.mxu0 0
    %297 = vmatpush1.bf16.msra.mxu0 0
    %298 = vmatprep.subr.bf16.mxu0 0
    %299 = vmatpush1.bf16.msra.mxu0 0
    %300 = vmatprep.subr.bf16.mxu0 0
    %301 = vmatpush1.bf16.msra.mxu0 0
    %302 = vmatprep.subr.bf16.mxu0 0
    %303 = vmatpush1.bf16.msra.mxu0 0
    %304 = vmatprep.subr.bf16.mxu0 0
    %305 = vmatpush1.bf16.msra.mxu0 0
    %306 = vmatprep.mubr.bf16.mxu0 0
    %307 = vmatmul.mubr.bf16.gmra.mrb[0].mxu0 %v272
    %v308 = vpop.f32.mrb[0].mxu0
    %v309 = vadd.f32 0.0, %v308
    %v310 = vpop.f32.mrb[0].mxu0
    %v311 = vpop.f32.mrb[0].mxu0
    %v312 = vpop.f32.mrb[0].mxu0
    %313 = vdwg.mxu0
    %v316 = vunpack.c.l.b16 %v62
    %v317 = vunpack.c.l.b16 %v63
    %v318 = vpack.c.b16 %v317, %v316
    %v321 = vsel %vm74, %v49, 0
    %323 = vmatprep.subr.bf16.mxu0 0
    %324 = vmatpush1.bf16.msra.mxu0 %v318
    %325 = vmatprep.subr.bf16.mxu0 0
    %326 = vmatpush1.bf16.msra.mxu0 0
    %327 = vmatprep.subr.bf16.mxu0 0
    %328 = vmatpush1.bf16.msra.mxu0 0
    %329 = vmatprep.subr.bf16.mxu0 0
    %330 = vmatpush1.bf16.msra.mxu0 0
    %331 = vmatprep.subr.bf16.mxu0 0
    %332 = vmatpush1.bf16.msra.mxu0 0
    %333 = vmatprep.subr.bf16.mxu0 0
    %334 = vmatpush1.bf16.msra.mxu0 0
    %335 = vmatprep.subr.bf16.mxu0 0
    %336 = vmatpush1.bf16.msra.mxu0 0
    %337 = vmatprep.subr.bf16.mxu0 0
    %338 = vmatpush1.bf16.msra.mxu0 0
    %339 = vmatprep.subr.bf16.mxu0 0
    %340 = vmatpush1.bf16.msra.mxu0 0
    %341 = vmatprep.subr.bf16.mxu0 0
    %342 = vmatpush1.bf16.msra.mxu0 0
    %343 = vmatprep.subr.bf16.mxu0 0
    %344 = vmatpush1.bf16.msra.mxu0 0
    %345 = vmatprep.subr.bf16.mxu0 0
    %346 = vmatpush1.bf16.msra.mxu0 0
    %347 = vmatprep.subr.bf16.mxu0 0
    %348 = vmatpush1.bf16.msra.mxu0 0
    %349 = vmatprep.subr.bf16.mxu0 0
    %350 = vmatpush1.bf16.msra.mxu0 0
    %351 = vmatprep.subr.bf16.mxu0 0
    %352 = vmatpush1.bf16.msra.mxu0 0
    %353 = vmatprep.subr.bf16.mxu0 0
    %354 = vmatpush1.bf16.msra.mxu0 0
    %355 = vmatprep.mubr.bf16.mxu0 0
    %356 = vmatmul.mubr.bf16.gmra.mrb[0].mxu0 %v321
    %v357 = vpop.f32.mrb[0].mxu0
    %v358 = vadd.f32 0.0, %v357
    %v359 = vpop.f32.mrb[0].mxu0
    %v360 = vpop.f32.mrb[0].mxu0
    %v361 = vpop.f32.mrb[0].mxu0
    %362 = vdwg.mxu0
    %v365 = vunpack.c.l.b16 %v64
    %v366 = vunpack.c.l.b16 %v65
    %v367 = vpack.c.b16 %v366, %v365
    %v370 = vsel %vm74, %v50, 0
    %372 = vmatprep.subr.bf16.mxu0 0
    %373 = vmatpush1.bf16.msra.mxu0 %v367
    %374 = vmatprep.subr.bf16.mxu0 0
    %375 = vmatpush1.bf16.msra.mxu0 0
    %376 = vmatprep.subr.bf16.mxu0 0
    %377 = vmatpush1.bf16.msra.mxu0 0
    %378 = vmatprep.subr.bf16.mxu0 0
    %379 = vmatpush1.bf16.msra.mxu0 0
    %380 = vmatprep.subr.bf16.mxu0 0
    %381 = vmatpush1.bf16.msra.mxu0 0
    %382 = vmatprep.subr.bf16.mxu0 0
    %383 = vmatpush1.bf16.msra.mxu0 0
    %384 = vmatprep.subr.bf16.mxu0 0
    %385 = vmatpush1.bf16.msra.mxu0 0
    %386 = vmatprep.subr.bf16.mxu0 0
    %387 = vmatpush1.bf16.msra.mxu0 0
    %388 = vmatprep.subr.bf16.mxu0 0
    %389 = vmatpush1.bf16.msra.mxu0 0
    %390 = vmatprep.subr.bf16.mxu0 0
    %391 = vmatpush1.bf16.msra.mxu0 0
    %392 = vmatprep.subr.bf16.mxu0 0
    %393 = vmatpush1.bf16.msra.mxu0 0
    %394 = vmatprep.subr.bf16.mxu0 0
    %395 = vmatpush1.bf16.msra.mxu0 0
    %396 = vmatprep.subr.bf16.mxu0 0
    %397 = vmatpush1.bf16.msra.mxu0 0
    %398 = vmatprep.subr.bf16.mxu0 0
    %399 = vmatpush1.bf16.msra.mxu0 0
    %400 = vmatprep.subr.bf16.mxu0 0
    %401 = vmatpush1.bf16.msra.mxu0 0
    %402 = vmatprep.subr.bf16.mxu0 0
    %403 = vmatpush1.bf16.msra.mxu0 0
    %404 = vmatprep.mubr.bf16.mxu0 0
    %405 = vmatmul.mubr.bf16.gmra.mrb[0].mxu0 %v370
    %v406 = vpop.f32.mrb[0].mxu0
    %v407 = vadd.f32 0.0, %v406
    %v408 = vpop.f32.mrb[0].mxu0
    %v409 = vpop.f32.mrb[0].mxu0
    %v410 = vpop.f32.mrb[0].mxu0
    %411 = vdwg.mxu0
    %v414 = vunpack.c.l.b16 %v66
    %v415 = vunpack.c.l.b16 %v67
    %v416 = vpack.c.b16 %v415, %v414
    %v419 = vsel %vm74, %v51, 0
    %421 = vmatprep.subr.bf16.mxu0 0
    %422 = vmatpush1.bf16.msra.mxu0 %v416
    %423 = vmatprep.subr.bf16.mxu0 0
    %424 = vmatpush1.bf16.msra.mxu0 0
    %425 = vmatprep.subr.bf16.mxu0 0
    %426 = vmatpush1.bf16.msra.mxu0 0
    %427 = vmatprep.subr.bf16.mxu0 0
    %428 = vmatpush1.bf16.msra.mxu0 0
    %429 = vmatprep.subr.bf16.mxu0 0
    %430 = vmatpush1.bf16.msra.mxu0 0
    %431 = vmatprep.subr.bf16.mxu0 0
    %432 = vmatpush1.bf16.msra.mxu0 0
    %433 = vmatprep.subr.bf16.mxu0 0
    %434 = vmatpush1.bf16.msra.mxu0 0
    %435 = vmatprep.subr.bf16.mxu0 0
    %436 = vmatpush1.bf16.msra.mxu0 0
    %437 = vmatprep.subr.bf16.mxu0 0
    %438 = vmatpush1.bf16.msra.mxu0 0
    %439 = vmatprep.subr.bf16.mxu0 0
    %440 = vmatpush1.bf16.msra.mxu0 0
    %441 = vmatprep.subr.bf16.mxu0 0
    %442 = vmatpush1.bf16.msra.mxu0 0
    %443 = vmatprep.subr.bf16.mxu0 0
    %444 = vmatpush1.bf16.msra.mxu0 0
    %445 = vmatprep.subr.bf16.mxu0 0
    %446 = vmatpush1.bf16.msra.mxu0 0
    %447 = vmatprep.subr.bf16.mxu0 0
    %448 = vmatpush1.bf16.msra.mxu0 0
    %449 = vmatprep.subr.bf16.mxu0 0
    %450 = vmatpush1.bf16.msra.mxu0 0
    %451 = vmatprep.subr.bf16.mxu0 0
    %452 = vmatpush1.bf16.msra.mxu0 0
    %453 = vmatprep.mubr.bf16.mxu0 0
    %454 = vmatmul.mubr.bf16.gmra.mrb[0].mxu0 %v419
    %v455 = vpop.f32.mrb[0].mxu0
    %v456 = vadd.f32 0.0, %v455
    %v457 = vpop.f32.mrb[0].mxu0
    %v458 = vpop.f32.mrb[0].mxu0
    %v459 = vpop.f32.mrb[0].mxu0
    %460 = vdwg.mxu0
    %v461 = vlaneseq
    %v462 = vshrl.u32 %v461, 7
    %v463 = vlaneseq
    %v464 = vand.u32 %v463, 127
    %v465 = vmul.u32 %v462, 8
    %vm466 = vcmp.ge.s32.totalorder %v464, %v465
    %v467 = vadd.s32 %v462, 1
    %v468 = vmul.u32 %v467, 8
    %vm469 = vcmp.lt.s32.totalorder %v464, %v468
    %vm470 = vmand %vm466, %vm469
    %v471 = vsel %vm470, 1, 0
    %v472 = vcvt.s32.f32 %v471
    %v473 = vadd.s32 %v462, 8
    %v474 = vadd.s32 %v462, 16
    %v475 = vadd.s32 %v462, 24
    %v476 = vmul.u32 %v464, 8
    %vm477 = vcmp.ge.s32.totalorder %v462, %v476
    %vm478 = vcmp.ge.s32.totalorder %v473, %v476
    %vm479 = vcmp.ge.s32.totalorder %v474, %v476
    %vm480 = vcmp.ge.s32.totalorder %v475, %v476
    %v481 = vadd.s32 %v464, 1
    %v482 = vmul.u32 %v481, 8
    %vm483 = vcmp.lt.s32.totalorder %v462, %v482
    %vm484 = vcmp.lt.s32.totalorder %v473, %v482
    %vm485 = vcmp.lt.s32.totalorder %v474, %v482
    %vm486 = vcmp.lt.s32.totalorder %v475, %v482
    %vm487 = vmand %vm477, %vm483
    %vm488 = vmand %vm478, %vm484
    %vm489 = vmand %vm479, %vm485
    %vm490 = vmand %vm480, %vm486
    %v491 = vsel %vm487, 1, 0
    %v492 = vsel %vm488, 1, 0
    %v493 = vsel %vm489, 1, 0
    %v494 = vsel %vm490, 1, 0
    %v495 = vcvt.s32.f32 %v491
    %v496 = vcvt.s32.f32 %v492
    %v497 = vcvt.s32.f32 %v493
    %v498 = vcvt.s32.f32 %v494
    %v499 = vld [vmem:[%s2] sm:$0xff]
    %v501 = vcombine.high %v499, %v499
    %v503 = vunpack.c.l.s4 1966171168
    %v504 = vunpack.c.0.s8 %v503
    %v505 = vlaneseq
    %v506 = vshrl.u32 %v505, 7
    %v507 = vsub.s32 %v504, %v506
    %v508 = vrot.slane %v499, %v507
    %v510 = vunpack.c.l.s4 1966171168
    %v511 = vunpack.c.0.s8 %v510
    %v512 = vlaneseq
    %v513 = vshrl.u32 %v512, 7
    %v514 = vsub.s32 %v511, %v513
    %v515 = vrot.slane %v501, %v514
    %v516 = vcombine.high %v508, %v508
    %v517 = vcombine.high %v515, %v515
    %v519 = vunpack.c.l.s4 1966171168
    %v520 = vunpack.c.0.s8 %v519
    %v521 = vlaneseq
    %v522 = vshrl.u32 %v521, 7
    %v523 = vsub.s32 %v520, %v522
    %v524 = vrot.slane %v508, %v523
    %v526 = vunpack.c.l.s4 1966171168
    %v527 = vunpack.c.0.s8 %v526
    %v528 = vlaneseq
    %v529 = vshrl.u32 %v528, 7
    %v530 = vsub.s32 %v527, %v529
    %v531 = vrot.slane %v515, %v530
    %v533 = vunpack.c.l.s4 1966171168
    %v534 = vunpack.c.0.s8 %v533
    %v535 = vlaneseq
    %v536 = vshrl.u32 %v535, 7
    %v537 = vsub.s32 %v534, %v536
    %v538 = vrot.slane %v516, %v537
    %v540 = vunpack.c.l.s4 1966171168
    %v541 = vunpack.c.0.s8 %v540
    %v542 = vlaneseq
    %v543 = vshrl.u32 %v542, 7
    %v544 = vsub.s32 %v541, %v543
    %v545 = vrot.slane %v517, %v544
    %v546 = vcombine.high %v524, %v524
    %v547 = vcombine.high %v531, %v531
    %v548 = vcombine.high %v538, %v538
    %v549 = vcombine.high %v545, %v545
    %v550 = vlaneseq
    %v551 = vshrl.u32 %v550, 7
    %v552 = vsub.s32 0, %v551
    %v553 = vrot.slane %v524, %v552
    %v554 = vlaneseq
    %v555 = vshrl.u32 %v554, 7
    %v556 = vsub.s32 0, %v555
    %v557 = vrot.slane %v538, %v556
    %v558 = vlaneseq
    %v559 = vshrl.u32 %v558, 7
    %v560 = vsub.s32 0, %v559
    %v561 = vrot.slane %v546, %v560
    %v562 = vlaneseq
    %v563 = vshrl.u32 %v562, 7
    %v564 = vsub.s32 0, %v563
    %v565 = vrot.slane %v548, %v564
    %v566 = vlaneseq
    %v567 = vshrl.u32 %v566, 7
    %v568 = vsub.s32 0, %v567
    %v569 = vrot.slane %v531, %v568
    %v570 = vlaneseq
    %v571 = vshrl.u32 %v570, 7
    %v572 = vsub.s32 0, %v571
    %v573 = vrot.slane %v545, %v572
    %v574 = vlaneseq
    %v575 = vshrl.u32 %v574, 7
    %v576 = vsub.s32 0, %v575
    %v577 = vrot.slane %v547, %v576
    %v578 = vlaneseq
    %v579 = vshrl.u32 %v578, 7
    %v580 = vsub.s32 0, %v579
    %v581 = vrot.slane %v549, %v580
    %vm590 = vcmask 31744
    %v591 = vsel %vm590, %v553, -inf
    %592 = vmax.xlane.f32.xlu0 %v591
    %v593 = vpop.xlane.xlu0 %592
    %v594 = vsel %vm590, %v557, -inf
    %595 = vmax.xlane.f32.xlu0 %v594
    %v596 = vpop.xlane.xlu0 %595
    %v597 = vsel %vm590, %v561, -inf
    %598 = vmax.xlane.f32.xlu0 %v597
    %v599 = vpop.xlane.xlu0 %598
    %v600 = vsel %vm590, %v565, -inf
    %601 = vmax.xlane.f32.xlu0 %v600
    %v602 = vpop.xlane.xlu0 %601
    %v603 = vsel %vm590, %v569, -inf
    %604 = vmax.xlane.f32.xlu0 %v603
    %v605 = vpop.xlane.xlu0 %604
    %v606 = vsel %vm590, %v573, -inf
    %607 = vmax.xlane.f32.xlu0 %v606
    %v608 = vpop.xlane.xlu0 %607
    %v609 = vsel %vm590, %v577, -inf
    %610 = vmax.xlane.f32.xlu0 %v609
    %v611 = vpop.xlane.xlu0 %610
    %v612 = vsel %vm590, %v581, -inf
    %613 = vmax.xlane.f32.xlu0 %v612
    %v614 = vpop.xlane.xlu0 %613
    %v615 = vsub.f32 %v553, %v593
    %v616 = vsub.f32 %v557, %v596
    %v617 = vsub.f32 %v561, %v599
    %v618 = vsub.f32 %v565, %v602
    %v619 = vsub.f32 %v569, %v605
    %v620 = vsub.f32 %v573, %v608
    %v621 = vsub.f32 %v577, %v611
    %v622 = vsub.f32 %v581, %v614
    %v623 = vmul.f32 %v615, 1.442695
    %v624 = vpow.pop %v623
    %v625 = vmul.f32 %v616, 1.442695
    %v626 = vpow.pop %v625
    %v627 = vmul.f32 %v617, 1.442695
    %v628 = vpow.pop %v627
    %v629 = vmul.f32 %v618, 1.442695
    %v630 = vpow.pop %v629
    %v631 = vmul.f32 %v619, 1.442695
    %v632 = vpow.pop %v631
    %v633 = vmul.f32 %v620, 1.442695
    %v634 = vpow.pop %v633
    %v635 = vmul.f32 %v621, 1.442695
    %v636 = vpow.pop %v635
    %v637 = vmul.f32 %v622, 1.442695
    %v638 = vpow.pop %v637
    %v639 = vsel %vm590, %v624, 0.0
    %640 = vadd.xlane.f32.xlu0 %v639
    %v641 = vpop.xlane.xlu0 %640
    %v642 = vsel %vm590, %v626, 0.0
    %643 = vadd.xlane.f32.xlu0 %v642
    %v644 = vpop.xlane.xlu0 %643
    %v645 = vsel %vm590, %v628, 0.0
    %646 = vadd.xlane.f32.xlu0 %v645
    %v647 = vpop.xlane.xlu0 %646
    %v648 = vsel %vm590, %v630, 0.0
    %649 = vadd.xlane.f32.xlu0 %v648
    %v650 = vpop.xlane.xlu0 %649
    %v651 = vsel %vm590, %v632, 0.0
    %652 = vadd.xlane.f32.xlu0 %v651
    %v653 = vpop.xlane.xlu0 %652
    %v654 = vsel %vm590, %v634, 0.0
    %655 = vadd.xlane.f32.xlu0 %v654
    %v656 = vpop.xlane.xlu0 %655
    %v657 = vsel %vm590, %v636, 0.0
    %658 = vadd.xlane.f32.xlu0 %v657
    %v659 = vpop.xlane.xlu0 %658
    %v660 = vsel %vm590, %v638, 0.0
    %661 = vadd.xlane.f32.xlu0 %v660
    %v662 = vpop.xlane.xlu0 %661
    %v663 = vrcp.pop %v641
    %v664 = vrcp.pop %v644
    %v665 = vrcp.pop %v647
    %v666 = vrcp.pop %v650
    %v667 = vrcp.pop %v653
    %v668 = vrcp.pop %v656
    %v669 = vrcp.pop %v659
    %v670 = vrcp.pop %v662
    %v671 = vmul.f32 %v624, %v663
    %v672 = vmul.f32 %v626, %v664
    %v673 = vmul.f32 %v628, %v665
    %v674 = vmul.f32 %v630, %v666
    %v675 = vmul.f32 %v632, %v667
    %v676 = vmul.f32 %v634, %v668
    %v677 = vmul.f32 %v636, %v669
    %v678 = vmul.f32 %v638, %v670
    %v680 = vsel %vm590, %v671, 0
    %v683 = vsel %vm590, %v672, 0
    %v686 = vsel %vm590, %v673, 0
    %v689 = vsel %vm590, %v674, 0
    %v692 = vsel %vm590, %v675, 0
    %v695 = vsel %vm590, %v676, 0
    %v698 = vsel %vm590, %v677, 0
    %v701 = vsel %vm590, %v678, 0
    %vm703 = vcmask 1043456
    %v705 = vsel %vm703, %v472, 0
    %707 = vmatprep.subr.mxu0 0.0
    %708 = vmatpush1.msra.mxu0 %v705
    %709 = vmatprep.subr.mxu0 0.0
    %710 = vmatpush1.msra.mxu0 0.0
    %711 = vmatprep.subr.mxu0 0.0
    %712 = vmatpush1.msra.mxu0 0.0
    %713 = vmatprep.subr.mxu0 0.0
    %714 = vmatpush1.msra.mxu0 0.0
    %715 = vmatprep.subr.mxu0 0.0
    %716 = vmatpush1.msra.mxu0 0.0
    %717 = vmatprep.subr.mxu0 0.0
    %718 = vmatpush1.msra.mxu0 0.0
    %719 = vmatprep.subr.mxu0 0.0
    %720 = vmatpush1.msra.mxu0 0.0
    %721 = vmatprep.subr.mxu0 0.0
    %722 = vmatpush1.msra.mxu0 0.0
    %723 = vmatprep.subr.mxu0 0.0
    %724 = vmatpush1.msra.mxu0 0.0
    %725 = vmatprep.subr.mxu0 0.0
    %726 = vmatpush1.msra.mxu0 0.0
    %727 = vmatprep.subr.mxu0 0.0
    %728 = vmatpush1.msra.mxu0 0.0
    %729 = vmatprep.subr.mxu0 0.0
    %730 = vmatpush1.msra.mxu0 0.0
    %731 = vmatprep.subr.mxu0 0.0
    %732 = vmatpush1.msra.mxu0 0.0
    %733 = vmatprep.subr.mxu0 0.0
    %734 = vmatpush1.msra.mxu0 0.0
    %735 = vmatprep.subr.mxu0 0.0
    %736 = vmatpush1.msra.mxu0 0.0
    %737 = vmatprep.subr.mxu0 0.0
    %738 = vmatpush1.msra.mxu0 0.0
    %739 = vmatprep.subr.mxu0 0.0
    %740 = vmatpush1.msra.mxu0 0.0
    %741 = vmatprep.subr.mxu0 0.0
    %742 = vmatpush1.msra.mxu0 0.0
    %743 = vmatprep.subr.mxu0 0.0
    %744 = vmatpush1.msra.mxu0 0.0
    %745 = vmatprep.subr.mxu0 0.0
    %746 = vmatpush1.msra.mxu0 0.0
    %747 = vmatprep.subr.mxu0 0.0
    %748 = vmatpush1.msra.mxu0 0.0
    %749 = vmatprep.subr.mxu0 0.0
    %750 = vmatpush1.msra.mxu0 0.0
    %751 = vmatprep.subr.mxu0 0.0
    %752 = vmatpush1.msra.mxu0 0.0
    %753 = vmatprep.subr.mxu0 0.0
    %754 = vmatpush1.msra.mxu0 0.0
    %755 = vmatprep.subr.mxu0 0.0
    %756 = vmatpush1.msra.mxu0 0.0
    %757 = vmatprep.subr.mxu0 0.0
    %758 = vmatpush1.msra.mxu0 0.0
    %759 = vmatprep.subr.mxu0 0.0
    %760 = vmatpush1.msra.mxu0 0.0
    %761 = vmatprep.subr.mxu0 0.0
    %762 = vmatpush1.msra.mxu0 0.0
    %763 = vmatprep.subr.mxu0 0.0
    %764 = vmatpush1.msra.mxu0 0.0
    %765 = vmatprep.subr.mxu0 0.0
    %766 = vmatpush1.msra.mxu0 0.0
    %767 = vmatprep.subr.mxu0 0.0
    %768 = vmatpush1.msra.mxu0 0.0
    %769 = vmatprep.subr.mxu0 0.0
    %770 = vmatpush1.msra.mxu0 0.0
    %771 = vmatprep.mubr.f32.mxu0 0.0
    %772 = vmatmul.mubr.f32.gmra.mrb[0].mxu0 %v680
    %v773 = vpop.f32.mrb[0].mxu0
    %v774 = vadd.f32 0.0, %v773
    %v775 = vpop.f32.mrb[0].mxu0
    %776 = vmatprep.mubr.f32.mxu0 0.0
    %777 = vmatmul.mubr.f32.gmra.mrb[0].mxu0 %v683
    %v778 = vpop.f32.mrb[0].mxu0
    %v779 = vadd.f32 0.0, %v778
    %v780 = vpop.f32.mrb[0].mxu0
    %781 = vmatprep.mubr.f32.mxu0 0.0
    %782 = vmatmul.mubr.f32.gmra.mrb[0].mxu0 %v686
    %v783 = vpop.f32.mrb[0].mxu0
    %v784 = vadd.f32 0.0, %v783
    %v785 = vpop.f32.mrb[0].mxu0
    %786 = vmatprep.mubr.f32.mxu0 0.0
    %787 = vmatmul.mubr.f32.gmra.mrb[0].mxu0 %v689
    %v788 = vpop.f32.mrb[0].mxu0
    %v789 = vadd.f32 0.0, %v788
    %v790 = vpop.f32.mrb[0].mxu0
    %791 = vmatprep.mubr.f32.mxu0 0.0
    %792 = vmatmul.mubr.f32.gmra.mrb[0].mxu0 %v692
    %v793 = vpop.f32.mrb[0].mxu0
    %v794 = vadd.f32 0.0, %v793
    %v795 = vpop.f32.mrb[0].mxu0
    %796 = vmatprep.mubr.f32.mxu0 0.0
    %797 = vmatmul.mubr.f32.gmra.mrb[0].mxu0 %v695
    %v798 = vpop.f32.mrb[0].mxu0
    %v799 = vadd.f32 0.0, %v798
    %v800 = vpop.f32.mrb[0].mxu0
    %801 = vmatprep.mubr.f32.mxu0 0.0
    %802 = vmatmul.mubr.f32.gmra.mrb[0].mxu0 %v698
    %v803 = vpop.f32.mrb[0].mxu0
    %v804 = vadd.f32 0.0, %v803
    %v805 = vpop.f32.mrb[0].mxu0
    %806 = vmatprep.mubr.f32.mxu0 0.0
    %807 = vmatmul.mubr.f32.gmra.mrb[0].mxu0 %v701
    %v808 = vpop.f32.mrb[0].mxu0
    %v809 = vadd.f32 0.0, %v808
    %v810 = vpop.f32.mrb[0].mxu0
    %811 = vdwg.mxu0
    %v812 = vmul.f32 %v774, %v113
    %v813 = vmul.f32 %v779, %v162
    %v814 = vmul.f32 %v784, %v211
    %v815 = vmul.f32 %v789, %v260
    %v816 = vmul.f32 %v794, %v309
    %v817 = vmul.f32 %v799, %v358
    %v818 = vmul.f32 %v804, %v407
    %v819 = vmul.f32 %v809, %v456
    %vm820 = vcmask 261120
    %v821 = vsel %vm820, %v812, 0.0
    %v822 = vsel %vm820, %v813, 0.0
    %v823 = vadd.f32 %v821, %v822
    %v824 = vsel %vm820, %v814, 0.0
    %v825 = vadd.f32 %v823, %v824
    %v826 = vsel %vm820, %v815, 0.0
    %v827 = vadd.f32 %v825, %v826
    %v828 = vsel %vm820, %v816, 0.0
    %v829 = vadd.f32 %v827, %v828
    %v830 = vsel %vm820, %v817, 0.0
    %v831 = vadd.f32 %v829, %v830
    %v832 = vsel %vm820, %v818, 0.0
    %v833 = vadd.f32 %v831, %v832
    %v834 = vsel %vm820, %v819, 0.0
    %v835 = vadd.f32 %v833, %v834
    %v836 = vmul.f32 %v835, %v835
    %v838 = vsel %vm820, %v836, 0
    %840 = vmatprep.subr.mxu0 0.0
    %841 = vmatpush1.msra.mxu0 %v495
    %842 = vmatprep.subr.mxu0 0.0
    %843 = vmatpush1.msra.mxu0 %v496
    %844 = vmatprep.subr.mxu0 0.0
    %845 = vmatpush1.msra.mxu0 %v497
    %846 = vmatprep.subr.mxu0 0.0
    %847 = vmatpush1.msra.mxu0 %v498
    %848 = vmatprep.subr.mxu0 0.0
    %849 = vmatpush1.msra.mxu0 0.0
    %850 = vmatprep.subr.mxu0 0.0
    %851 = vmatpush1.msra.mxu0 0.0
    %852 = vmatprep.subr.mxu0 0.0
    %853 = vmatpush1.msra.mxu0 0.0
    %854 = vmatprep.subr.mxu0 0.0
    %855 = vmatpush1.msra.mxu0 0.0
    %856 = vmatprep.subr.mxu0 0.0
    %857 = vmatpush1.msra.mxu0 0.0
    %858 = vmatprep.subr.mxu0 0.0
    %859 = vmatpush1.msra.mxu0 0.0
    %860 = vmatprep.subr.mxu0 0.0
    %861 = vmatpush1.msra.mxu0 0.0
    %862 = vmatprep.subr.mxu0 0.0
    %863 = vmatpush1.msra.mxu0 0.0
    %864 = vmatprep.subr.mxu0 0.0
    %865 = vmatpush1.msra.mxu0 0.0
    %866 = vmatprep.subr.mxu0 0.0
    %867 = vmatpush1.msra.mxu0 0.0
    %868 = vmatprep.subr.mxu0 0.0
    %869 = vmatpush1.msra.mxu0 0.0
    %870 = vmatprep.subr.mxu0 0.0
    %871 = vmatpush1.msra.mxu0 0.0
    %872 = vmatprep.subr.mxu0 0.0
    %873 = vmatpush1.msra.mxu0 0.0
    %874 = vmatprep.subr.mxu0 0.0
    %875 = vmatpush1.msra.mxu0 0.0
    %876 = vmatprep.subr.mxu0 0.0
    %877 = vmatpush1.msra.mxu0 0.0
    %878 = vmatprep.subr.mxu0 0.0
    %879 = vmatpush1.msra.mxu0 0.0
    %880 = vmatprep.subr.mxu0 0.0
    %881 = vmatpush1.msra.mxu0 0.0
    %882 = vmatprep.subr.mxu0 0.0
    %883 = vmatpush1.msra.mxu0 0.0
    %884 = vmatprep.subr.mxu0 0.0
    %885 = vmatpush1.msra.mxu0 0.0
    %886 = vmatprep.subr.mxu0 0.0
    %887 = vmatpush1.msra.mxu0 0.0
    %888 = vmatprep.subr.mxu0 0.0
    %889 = vmatpush1.msra.mxu0 0.0
    %890 = vmatprep.subr.mxu0 0.0
    %891 = vmatpush1.msra.mxu0 0.0
    %892 = vmatprep.subr.mxu0 0.0
    %893 = vmatpush1.msra.mxu0 0.0
    %894 = vmatprep.subr.mxu0 0.0
    %895 = vmatpush1.msra.mxu0 0.0
    %896 = vmatprep.subr.mxu0 0.0
    %897 = vmatpush1.msra.mxu0 0.0
    %898 = vmatprep.subr.mxu0 0.0
    %899 = vmatpush1.msra.mxu0 0.0
    %900 = vmatprep.subr.mxu0 0.0
    %901 = vmatpush1.msra.mxu0 0.0
    %902 = vmatprep.subr.mxu0 0.0
    %903 = vmatpush1.msra.mxu0 0.0
    %904 = vmatprep.mubr.f32.mxu0 0.0
    %905 = vmatmul.mubr.f32.gmra.mrb[0].mxu0 %v838
    %v906 = vpop.f32.mrb[0].mxu0
    %v907 = vadd.f32 0.0, %v906
    %v908 = vpop.f32.mrb[0].mxu0
    %909 = vdwg.mxu0
    %v910 = vadd.f32 %v907, 1e-12
    %v911 = vrsqrt.pop %v910
    %v912 = vmul.f32 %v907, %v911
    %v913 = vadd.f32 %v907, 1.0
    %v914 = vrcp.pop %v913
    %v915 = vmul.f32 %v912, %v914
    %v917 = vsel %vm590, %v915, 0
    %919 = vmatprep.subr.mxu0 0.0
    %920 = vmatpush1.msra.mxu0 %v705
    %921 = vmatprep.subr.mxu0 0.0
    %922 = vmatpush1.msra.mxu0 0.0
    %923 = vmatprep.subr.mxu0 0.0
    %924 = vmatpush1.msra.mxu0 0.0
    %925 = vmatprep.subr.mxu0 0.0
    %926 = vmatpush1.msra.mxu0 0.0
    %927 = vmatprep.subr.mxu0 0.0
    %928 = vmatpush1.msra.mxu0 0.0
    %929 = vmatprep.subr.mxu0 0.0
    %930 = vmatpush1.msra.mxu0 0.0
    %931 = vmatprep.subr.mxu0 0.0
    %932 = vmatpush1.msra.mxu0 0.0
    %933 = vmatprep.subr.mxu0 0.0
    %934 = vmatpush1.msra.mxu0 0.0
    %935 = vmatprep.subr.mxu0 0.0
    %936 = vmatpush1.msra.mxu0 0.0
    %937 = vmatprep.subr.mxu0 0.0
    %938 = vmatpush1.msra.mxu0 0.0
    %939 = vmatprep.subr.mxu0 0.0
    %940 = vmatpush1.msra.mxu0 0.0
    %941 = vmatprep.subr.mxu0 0.0
    %942 = vmatpush1.msra.mxu0 0.0
    %943 = vmatprep.subr.mxu0 0.0
    %944 = vmatpush1.msra.mxu0 0.0
    %945 = vmatprep.subr.mxu0 0.0
    %946 = vmatpush1.msra.mxu0 0.0
    %947 = vmatprep.subr.mxu0 0.0
    %948 = vmatpush1.msra.mxu0 0.0
    %949 = vmatprep.subr.mxu0 0.0
    %950 = vmatpush1.msra.mxu0 0.0
    %951 = vmatprep.subr.mxu0 0.0
    %952 = vmatpush1.msra.mxu0 0.0
    %953 = vmatprep.subr.mxu0 0.0
    %954 = vmatpush1.msra.mxu0 0.0
    %955 = vmatprep.subr.mxu0 0.0
    %956 = vmatpush1.msra.mxu0 0.0
    %957 = vmatprep.subr.mxu0 0.0
    %958 = vmatpush1.msra.mxu0 0.0
    %959 = vmatprep.subr.mxu0 0.0
    %960 = vmatpush1.msra.mxu0 0.0
    %961 = vmatprep.subr.mxu0 0.0
    %962 = vmatpush1.msra.mxu0 0.0
    %963 = vmatprep.subr.mxu0 0.0
    %964 = vmatpush1.msra.mxu0 0.0
    %965 = vmatprep.subr.mxu0 0.0
    %966 = vmatpush1.msra.mxu0 0.0
    %967 = vmatprep.subr.mxu0 0.0
    %968 = vmatpush1.msra.mxu0 0.0
    %969 = vmatprep.subr.mxu0 0.0
    %970 = vmatpush1.msra.mxu0 0.0
    %971 = vmatprep.subr.mxu0 0.0
    %972 = vmatpush1.msra.mxu0 0.0
    %973 = vmatprep.subr.mxu0 0.0
    %974 = vmatpush1.msra.mxu0 0.0
    %975 = vmatprep.subr.mxu0 0.0
    %976 = vmatpush1.msra.mxu0 0.0
    %977 = vmatprep.subr.mxu0 0.0
    %978 = vmatpush1.msra.mxu0 0.0
    %979 = vmatprep.subr.mxu0 0.0
    %980 = vmatpush1.msra.mxu0 0.0
    %981 = vmatprep.subr.mxu0 0.0
    %982 = vmatpush1.msra.mxu0 0.0
    %983 = vmatprep.mubr.f32.mxu0 0.0
    %984 = vmatmul.mubr.f32.gmra.mrb[0].mxu0 %v917
    %v985 = vpop.f32.mrb[0].mxu0
    %v986 = vadd.f32 0.0, %v985
    %v987 = vpop.f32.mrb[0].mxu0
    %988 = vdwg.mxu0
    %v989 = vmul.f32 %v835, %v986
    %v990 = vmul.f32 %v113, %v989
    %v991 = vmul.f32 %v162, %v989
    %v992 = vmul.f32 %v211, %v989
    %v993 = vmul.f32 %v260, %v989
    %v994 = vmul.f32 %v309, %v989
    %v995 = vmul.f32 %v358, %v989
    %v996 = vmul.f32 %v407, %v989
    %v997 = vmul.f32 %v456, %v989
    %v999 = vsel %vm820, %v990, 0
    %v1002 = vsel %vm820, %v991, 0
    %v1005 = vsel %vm820, %v992, 0
    %v1008 = vsel %vm820, %v993, 0
    %v1011 = vsel %vm820, %v994, 0
    %v1014 = vsel %vm820, %v995, 0
    %v1017 = vsel %vm820, %v996, 0
    %v1020 = vsel %vm820, %v997, 0
    %1022 = vmatprep.subr.mxu0 0.0
    %1023 = vmatpush1.msra.mxu0 %v495
    %1024 = vmatprep.subr.mxu0 0.0
    %1025 = vmatpush1.msra.mxu0 %v496
    %1026 = vmatprep.subr.mxu0 0.0
    %1027 = vmatpush1.msra.mxu0 %v497
    %1028 = vmatprep.subr.mxu0 0.0
    %1029 = vmatpush1.msra.mxu0 %v498
    %1030 = vmatprep.subr.mxu0 0.0
    %1031 = vmatpush1.msra.mxu0 0.0
    %1032 = vmatprep.subr.mxu0 0.0
    %1033 = vmatpush1.msra.mxu0 0.0
    %1034 = vmatprep.subr.mxu0 0.0
    %1035 = vmatpush1.msra.mxu0 0.0
    %1036 = vmatprep.subr.mxu0 0.0
    %1037 = vmatpush1.msra.mxu0 0.0
    %1038 = vmatprep.subr.mxu0 0.0
    %1039 = vmatpush1.msra.mxu0 0.0
    %1040 = vmatprep.subr.mxu0 0.0
    %1041 = vmatpush1.msra.mxu0 0.0
    %1042 = vmatprep.subr.mxu0 0.0
    %1043 = vmatpush1.msra.mxu0 0.0
    %1044 = vmatprep.subr.mxu0 0.0
    %1045 = vmatpush1.msra.mxu0 0.0
    %1046 = vmatprep.subr.mxu0 0.0
    %1047 = vmatpush1.msra.mxu0 0.0
    %1048 = vmatprep.subr.mxu0 0.0
    %1049 = vmatpush1.msra.mxu0 0.0
    %1050 = vmatprep.subr.mxu0 0.0
    %1051 = vmatpush1.msra.mxu0 0.0
    %1052 = vmatprep.subr.mxu0 0.0
    %1053 = vmatpush1.msra.mxu0 0.0
    %1054 = vmatprep.subr.mxu0 0.0
    %1055 = vmatpush1.msra.mxu0 0.0
    %1056 = vmatprep.subr.mxu0 0.0
    %1057 = vmatpush1.msra.mxu0 0.0
    %1058 = vmatprep.subr.mxu0 0.0
    %1059 = vmatpush1.msra.mxu0 0.0
    %1060 = vmatprep.subr.mxu0 0.0
    %1061 = vmatpush1.msra.mxu0 0.0
    %1062 = vmatprep.subr.mxu0 0.0
    %1063 = vmatpush1.msra.mxu0 0.0
    %1064 = vmatprep.subr.mxu0 0.0
    %1065 = vmatpush1.msra.mxu0 0.0
    %1066 = vmatprep.subr.mxu0 0.0
    %1067 = vmatpush1.msra.mxu0 0.0
    %1068 = vmatprep.subr.mxu0 0.0
    %1069 = vmatpush1.msra.mxu0 0.0
    %1070 = vmatprep.subr.mxu0 0.0
    %1071 = vmatpush1.msra.mxu0 0.0
    %1072 = vmatprep.subr.mxu0 0.0
    %1073 = vmatpush1.msra.mxu0 0.0
    %1074 = vmatprep.subr.mxu0 0.0
    %1075 = vmatpush1.msra.mxu0 0.0
    %1076 = vmatprep.subr.mxu0 0.0
    %1077 = vmatpush1.msra.mxu0 0.0
    %1078 = vmatprep.subr.mxu0 0.0
    %1079 = vmatpush1.msra.mxu0 0.0
    %1080 = vmatprep.subr.mxu0 0.0
    %1081 = vmatpush1.msra.mxu0 0.0
    %1082 = vmatprep.subr.mxu0 0.0
    %1083 = vmatpush1.msra.mxu0 0.0
    %1084 = vmatprep.subr.mxu0 0.0
    %1085 = vmatpush1.msra.mxu0 0.0
    %1086 = vmatprep.mubr.f32.mxu0 0.0
    %1087 = vmatmul.mubr.f32.gmra.mrb[0].mxu0 %v999
    %v1088 = vpop.f32.mrb[0].mxu0
    %v1089 = vadd.f32 0.0, %v1088
    %v1090 = vpop.f32.mrb[0].mxu0
    %1091 = vmatprep.mubr.f32.mxu0 0.0
    %1092 = vmatmul.mubr.f32.gmra.mrb[0].mxu0 %v1002
    %v1093 = vpop.f32.mrb[0].mxu0
    %v1094 = vadd.f32 0.0, %v1093
    %v1095 = vpop.f32.mrb[0].mxu0
    %1096 = vmatprep.mubr.f32.mxu0 0.0
    %1097 = vmatmul.mubr.f32.gmra.mrb[0].mxu0 %v1005
    %v1098 = vpop.f32.mrb[0].mxu0
    %v1099 = vadd.f32 0.0, %v1098
    %v1100 = vpop.f32.mrb[0].mxu0
    %1101 = vmatprep.mubr.f32.mxu0 0.0
    %1102 = vmatmul.mubr.f32.gmra.mrb[0].mxu0 %v1008
    %v1103 = vpop.f32.mrb[0].mxu0
    %v1104 = vadd.f32 0.0, %v1103
    %v1105 = vpop.f32.mrb[0].mxu0
    %1106 = vmatprep.mubr.f32.mxu0 0.0
    %1107 = vmatmul.mubr.f32.gmra.mrb[0].mxu0 %v1011
    %v1108 = vpop.f32.mrb[0].mxu0
    %v1109 = vadd.f32 0.0, %v1108
    %v1110 = vpop.f32.mrb[0].mxu0
    %1111 = vmatprep.mubr.f32.mxu0 0.0
    %1112 = vmatmul.mubr.f32.gmra.mrb[0].mxu0 %v1014
    %v1113 = vpop.f32.mrb[0].mxu0
    %v1114 = vadd.f32 0.0, %v1113
    %v1115 = vpop.f32.mrb[0].mxu0
    %1116 = vmatprep.mubr.f32.mxu0 0.0
    %1117 = vmatmul.mubr.f32.gmra.mrb[0].mxu0 %v1017
    %v1118 = vpop.f32.mrb[0].mxu0
    %v1119 = vadd.f32 0.0, %v1118
    %v1120 = vpop.f32.mrb[0].mxu0
    %1121 = vmatprep.mubr.f32.mxu0 0.0
    %1122 = vmatmul.mubr.f32.gmra.mrb[0].mxu0 %v1020
    %v1123 = vpop.f32.mrb[0].mxu0
    %v1124 = vadd.f32 0.0, %v1123
    %v1125 = vpop.f32.mrb[0].mxu0
    %1126 = vdwg.mxu0
    %v1127 = vadd.f32 %v553, %v1089
    %v1128 = vadd.f32 %v557, %v1094
    %v1129 = vadd.f32 %v561, %v1099
    %v1130 = vadd.f32 %v565, %v1104
    %v1131 = vadd.f32 %v569, %v1109
    %v1132 = vadd.f32 %v573, %v1114
    %v1133 = vadd.f32 %v577, %v1119
    %v1134 = vadd.f32 %v581, %v1124
    %v1135 = vsel %vm590, %v1127, -inf
    %1136 = vmax.xlane.f32.xlu0 %v1135
    %v1137 = vpop.xlane.xlu0 %1136
    %v1138 = vsel %vm590, %v1128, -inf
    %1139 = vmax.xlane.f32.xlu0 %v1138
    %v1140 = vpop.xlane.xlu0 %1139
    %v1141 = vsel %vm590, %v1129, -inf
    %1142 = vmax.xlane.f32.xlu0 %v1141
    %v1143 = vpop.xlane.xlu0 %1142
    %v1144 = vsel %vm590, %v1130, -inf
    %1145 = vmax.xlane.f32.xlu0 %v1144
    %v1146 = vpop.xlane.xlu0 %1145
    %v1147 = vsel %vm590, %v1131, -inf
    %1148 = vmax.xlane.f32.xlu0 %v1147
    %v1149 = vpop.xlane.xlu0 %1148
    %v1150 = vsel %vm590, %v1132, -inf
    %1151 = vmax.xlane.f32.xlu0 %v1150
    %v1152 = vpop.xlane.xlu0 %1151
    %v1153 = vsel %vm590, %v1133, -inf
    %1154 = vmax.xlane.f32.xlu0 %v1153
    %v1155 = vpop.xlane.xlu0 %1154
    %v1156 = vsel %vm590, %v1134, -inf
    %1157 = vmax.xlane.f32.xlu0 %v1156
    %v1158 = vpop.xlane.xlu0 %1157
    %v1159 = vsub.f32 %v1127, %v1137
    %v1160 = vsub.f32 %v1128, %v1140
    %v1161 = vsub.f32 %v1129, %v1143
    %v1162 = vsub.f32 %v1130, %v1146
    %v1163 = vsub.f32 %v1131, %v1149
    %v1164 = vsub.f32 %v1132, %v1152
    %v1165 = vsub.f32 %v1133, %v1155
    %v1166 = vsub.f32 %v1134, %v1158
    %v1167 = vmul.f32 %v1159, 1.442695
    %v1168 = vpow.pop %v1167
    %v1169 = vmul.f32 %v1160, 1.442695
    %v1170 = vpow.pop %v1169
    %v1171 = vmul.f32 %v1161, 1.442695
    %v1172 = vpow.pop %v1171
    %v1173 = vmul.f32 %v1162, 1.442695
    %v1174 = vpow.pop %v1173
    %v1175 = vmul.f32 %v1163, 1.442695
    %v1176 = vpow.pop %v1175
    %v1177 = vmul.f32 %v1164, 1.442695
    %v1178 = vpow.pop %v1177
    %v1179 = vmul.f32 %v1165, 1.442695
    %v1180 = vpow.pop %v1179
    %v1181 = vmul.f32 %v1166, 1.442695
    %v1182 = vpow.pop %v1181
    %v1183 = vsel %vm590, %v1168, 0.0
    %1184 = vadd.xlane.f32.xlu0 %v1183
    %v1185 = vpop.xlane.xlu0 %1184
    %v1186 = vsel %vm590, %v1170, 0.0
    %1187 = vadd.xlane.f32.xlu0 %v1186
    %v1188 = vpop.xlane.xlu0 %1187
    %v1189 = vsel %vm590, %v1172, 0.0
    %1190 = vadd.xlane.f32.xlu0 %v1189
    %v1191 = vpop.xlane.xlu0 %1190
    %v1192 = vsel %vm590, %v1174, 0.0
    %1193 = vadd.xlane.f32.xlu0 %v1192
    %v1194 = vpop.xlane.xlu0 %1193
    %v1195 = vsel %vm590, %v1176, 0.0
    %1196 = vadd.xlane.f32.xlu0 %v1195
    %v1197 = vpop.xlane.xlu0 %1196
    %v1198 = vsel %vm590, %v1178, 0.0
    %1199 = vadd.xlane.f32.xlu0 %v1198
    %v1200 = vpop.xlane.xlu0 %1199
    %v1201 = vsel %vm590, %v1180, 0.0
    %1202 = vadd.xlane.f32.xlu0 %v1201
    %v1203 = vpop.xlane.xlu0 %1202
    %v1204 = vsel %vm590, %v1182, 0.0
    %1205 = vadd.xlane.f32.xlu0 %v1204
    %v1206 = vpop.xlane.xlu0 %1205
    %v1207 = vrcp.pop %v1185
    %v1208 = vrcp.pop %v1188
    %v1209 = vrcp.pop %v1191
    %v1210 = vrcp.pop %v1194
    %v1211 = vrcp.pop %v1197
    %v1212 = vrcp.pop %v1200
    %v1213 = vrcp.pop %v1203
    %v1214 = vrcp.pop %v1206
    %v1215 = vmul.f32 %v1168, %v1207
    %v1216 = vmul.f32 %v1170, %v1208
    %v1217 = vmul.f32 %v1172, %v1209
    %v1218 = vmul.f32 %v1174, %v1210
    %v1219 = vmul.f32 %v1176, %v1211
    %v1220 = vmul.f32 %v1178, %v1212
    %v1221 = vmul.f32 %v1180, %v1213
    %v1222 = vmul.f32 %v1182, %v1214
    %v1224 = vsel %vm590, %v1215, 0
    %v1227 = vsel %vm590, %v1216, 0
    %v1230 = vsel %vm590, %v1217, 0
    %v1233 = vsel %vm590, %v1218, 0
    %v1236 = vsel %vm590, %v1219, 0
    %v1239 = vsel %vm590, %v1220, 0
    %v1242 = vsel %vm590, %v1221, 0
    %v1245 = vsel %vm590, %v1222, 0
    %1247 = vmatprep.subr.mxu0 0.0
    %1248 = vmatpush1.msra.mxu0 %v705
    %1249 = vmatprep.subr.mxu0 0.0
    %1250 = vmatpush1.msra.mxu0 0.0
    %1251 = vmatprep.subr.mxu0 0.0
    %1252 = vmatpush1.msra.mxu0 0.0
    %1253 = vmatprep.subr.mxu0 0.0
    %1254 = vmatpush1.msra.mxu0 0.0
    %1255 = vmatprep.subr.mxu0 0.0
    %1256 = vmatpush1.msra.mxu0 0.0
    %1257 = vmatprep.subr.mxu0 0.0
    %1258 = vmatpush1.msra.mxu0 0.0
    %1259 = vmatprep.subr.mxu0 0.0
    %1260 = vmatpush1.msra.mxu0 0.0
    %1261 = vmatprep.subr.mxu0 0.0
    %1262 = vmatpush1.msra.mxu0 0.0
    %1263 = vmatprep.subr.mxu0 0.0
    %1264 = vmatpush1.msra.mxu0 0.0
    %1265 = vmatprep.subr.mxu0 0.0
    %1266 = vmatpush1.msra.mxu0 0.0
    %1267 = vmatprep.subr.mxu0 0.0
    %1268 = vmatpush1.msra.mxu0 0.0
    %1269 = vmatprep.subr.mxu0 0.0
    %1270 = vmatpush1.msra.mxu0 0.0
    %1271 = vmatprep.subr.mxu0 0.0
    %1272 = vmatpush1.msra.mxu0 0.0
    %1273 = vmatprep.subr.mxu0 0.0
    %1274 = vmatpush1.msra.mxu0 0.0
    %1275 = vmatprep.subr.mxu0 0.0
    %1276 = vmatpush1.msra.mxu0 0.0
    %1277 = vmatprep.subr.mxu0 0.0
    %1278 = vmatpush1.msra.mxu0 0.0
    %1279 = vmatprep.subr.mxu0 0.0
    %1280 = vmatpush1.msra.mxu0 0.0
    %1281 = vmatprep.subr.mxu0 0.0
    %1282 = vmatpush1.msra.mxu0 0.0
    %1283 = vmatprep.subr.mxu0 0.0
    %1284 = vmatpush1.msra.mxu0 0.0
    %1285 = vmatprep.subr.mxu0 0.0
    %1286 = vmatpush1.msra.mxu0 0.0
    %1287 = vmatprep.subr.mxu0 0.0
    %1288 = vmatpush1.msra.mxu0 0.0
    %1289 = vmatprep.subr.mxu0 0.0
    %1290 = vmatpush1.msra.mxu0 0.0
    %1291 = vmatprep.subr.mxu0 0.0
    %1292 = vmatpush1.msra.mxu0 0.0
    %1293 = vmatprep.subr.mxu0 0.0
    %1294 = vmatpush1.msra.mxu0 0.0
    %1295 = vmatprep.subr.mxu0 0.0
    %1296 = vmatpush1.msra.mxu0 0.0
    %1297 = vmatprep.subr.mxu0 0.0
    %1298 = vmatpush1.msra.mxu0 0.0
    %1299 = vmatprep.subr.mxu0 0.0
    %1300 = vmatpush1.msra.mxu0 0.0
    %1301 = vmatprep.subr.mxu0 0.0
    %1302 = vmatpush1.msra.mxu0 0.0
    %1303 = vmatprep.subr.mxu0 0.0
    %1304 = vmatpush1.msra.mxu0 0.0
    %1305 = vmatprep.subr.mxu0 0.0
    %1306 = vmatpush1.msra.mxu0 0.0
    %1307 = vmatprep.subr.mxu0 0.0
    %1308 = vmatpush1.msra.mxu0 0.0
    %1309 = vmatprep.subr.mxu0 0.0
    %1310 = vmatpush1.msra.mxu0 0.0
    %1311 = vmatprep.mubr.f32.mxu0 0.0
    %1312 = vmatmul.mubr.f32.gmra.mrb[0].mxu0 %v1224
    %v1313 = vpop.f32.mrb[0].mxu0
    %v1314 = vadd.f32 0.0, %v1313
    %v1315 = vpop.f32.mrb[0].mxu0
    %1316 = vmatprep.mubr.f32.mxu0 0.0
    %1317 = vmatmul.mubr.f32.gmra.mrb[0].mxu0 %v1227
    %v1318 = vpop.f32.mrb[0].mxu0
    %v1319 = vadd.f32 0.0, %v1318
    %v1320 = vpop.f32.mrb[0].mxu0
    %1321 = vmatprep.mubr.f32.mxu0 0.0
    %1322 = vmatmul.mubr.f32.gmra.mrb[0].mxu0 %v1230
    %v1323 = vpop.f32.mrb[0].mxu0
    %v1324 = vadd.f32 0.0, %v1323
    %v1325 = vpop.f32.mrb[0].mxu0
    %1326 = vmatprep.mubr.f32.mxu0 0.0
    %1327 = vmatmul.mubr.f32.gmra.mrb[0].mxu0 %v1233
    %v1328 = vpop.f32.mrb[0].mxu0
    %v1329 = vadd.f32 0.0, %v1328
    %v1330 = vpop.f32.mrb[0].mxu0
    %1331 = vmatprep.mubr.f32.mxu0 0.0
    %1332 = vmatmul.mubr.f32.gmra.mrb[0].mxu0 %v1236
    %v1333 = vpop.f32.mrb[0].mxu0
    %v1334 = vadd.f32 0.0, %v1333
    %v1335 = vpop.f32.mrb[0].mxu0
    %1336 = vmatprep.mubr.f32.mxu0 0.0
    %1337 = vmatmul.mubr.f32.gmra.mrb[0].mxu0 %v1239
    %v1338 = vpop.f32.mrb[0].mxu0
    %v1339 = vadd.f32 0.0, %v1338
    %v1340 = vpop.f32.mrb[0].mxu0
    %1341 = vmatprep.mubr.f32.mxu0 0.0
    %1342 = vmatmul.mubr.f32.gmra.mrb[0].mxu0 %v1242
    %v1343 = vpop.f32.mrb[0].mxu0
    %v1344 = vadd.f32 0.0, %v1343
    %v1345 = vpop.f32.mrb[0].mxu0
    %1346 = vmatprep.mubr.f32.mxu0 0.0
    %1347 = vmatmul.mubr.f32.gmra.mrb[0].mxu0 %v1245
    %v1348 = vpop.f32.mrb[0].mxu0
    %v1349 = vadd.f32 0.0, %v1348
    %v1350 = vpop.f32.mrb[0].mxu0
    %1351 = vdwg.mxu0
    %v1352 = vmul.f32 %v1314, %v113
    %v1353 = vmul.f32 %v1319, %v162
    %v1354 = vmul.f32 %v1324, %v211
    %v1355 = vmul.f32 %v1329, %v260
    %v1356 = vmul.f32 %v1334, %v309
    %v1357 = vmul.f32 %v1339, %v358
    %v1358 = vmul.f32 %v1344, %v407
    %v1359 = vmul.f32 %v1349, %v456
    %v1360 = vsel %vm820, %v1352, 0.0
    %v1361 = vsel %vm820, %v1353, 0.0
    %v1362 = vadd.f32 %v1360, %v1361
    %v1363 = vsel %vm820, %v1354, 0.0
    %v1364 = vadd.f32 %v1362, %v1363
    %v1365 = vsel %vm820, %v1355, 0.0
    %v1366 = vadd.f32 %v1364, %v1365
    %v1367 = vsel %vm820, %v1356, 0.0
    %v1368 = vadd.f32 %v1366, %v1367
    %v1369 = vsel %vm820, %v1357, 0.0
    %v1370 = vadd.f32 %v1368, %v1369
    %v1371 = vsel %vm820, %v1358, 0.0
    %v1372 = vadd.f32 %v1370, %v1371
    %v1373 = vsel %vm820, %v1359, 0.0
    %v1374 = vadd.f32 %v1372, %v1373
    %v1375 = vmul.f32 %v1374, %v1374
    %v1377 = vsel %vm820, %v1375, 0
    %1379 = vmatprep.subr.mxu0 0.0
    %1380 = vmatpush1.msra.mxu0 %v495
    %1381 = vmatprep.subr.mxu0 0.0
    %1382 = vmatpush1.msra.mxu0 %v496
    %1383 = vmatprep.subr.mxu0 0.0
    %1384 = vmatpush1.msra.mxu0 %v497
    %1385 = vmatprep.subr.mxu0 0.0
    %1386 = vmatpush1.msra.mxu0 %v498
    %1387 = vmatprep.subr.mxu0 0.0
    %1388 = vmatpush1.msra.mxu0 0.0
    %1389 = vmatprep.subr.mxu0 0.0
    %1390 = vmatpush1.msra.mxu0 0.0
    %1391 = vmatprep.subr.mxu0 0.0
    %1392 = vmatpush1.msra.mxu0 0.0
    %1393 = vmatprep.subr.mxu0 0.0
    %1394 = vmatpush1.msra.mxu0 0.0
    %1395 = vmatprep.subr.mxu0 0.0
    %1396 = vmatpush1.msra.mxu0 0.0
    %1397 = vmatprep.subr.mxu0 0.0
    %1398 = vmatpush1.msra.mxu0 0.0
    %1399 = vmatprep.subr.mxu0 0.0
    %1400 = vmatpush1.msra.mxu0 0.0
    %1401 = vmatprep.subr.mxu0 0.0
    %1402 = vmatpush1.msra.mxu0 0.0
    %1403 = vmatprep.subr.mxu0 0.0
    %1404 = vmatpush1.msra.mxu0 0.0
    %1405 = vmatprep.subr.mxu0 0.0
    %1406 = vmatpush1.msra.mxu0 0.0
    %1407 = vmatprep.subr.mxu0 0.0
    %1408 = vmatpush1.msra.mxu0 0.0
    %1409 = vmatprep.subr.mxu0 0.0
    %1410 = vmatpush1.msra.mxu0 0.0
    %1411 = vmatprep.subr.mxu0 0.0
    %1412 = vmatpush1.msra.mxu0 0.0
    %1413 = vmatprep.subr.mxu0 0.0
    %1414 = vmatpush1.msra.mxu0 0.0
    %1415 = vmatprep.subr.mxu0 0.0
    %1416 = vmatpush1.msra.mxu0 0.0
    %1417 = vmatprep.subr.mxu0 0.0
    %1418 = vmatpush1.msra.mxu0 0.0
    %1419 = vmatprep.subr.mxu0 0.0
    %1420 = vmatpush1.msra.mxu0 0.0
    %1421 = vmatprep.subr.mxu0 0.0
    %1422 = vmatpush1.msra.mxu0 0.0
    %1423 = vmatprep.subr.mxu0 0.0
    %1424 = vmatpush1.msra.mxu0 0.0
    %1425 = vmatprep.subr.mxu0 0.0
    %1426 = vmatpush1.msra.mxu0 0.0
    %1427 = vmatprep.subr.mxu0 0.0
    %1428 = vmatpush1.msra.mxu0 0.0
    %1429 = vmatprep.subr.mxu0 0.0
    %1430 = vmatpush1.msra.mxu0 0.0
    %1431 = vmatprep.subr.mxu0 0.0
    %1432 = vmatpush1.msra.mxu0 0.0
    %1433 = vmatprep.subr.mxu0 0.0
    %1434 = vmatpush1.msra.mxu0 0.0
    %1435 = vmatprep.subr.mxu0 0.0
    %1436 = vmatpush1.msra.mxu0 0.0
    %1437 = vmatprep.subr.mxu0 0.0
    %1438 = vmatpush1.msra.mxu0 0.0
    %1439 = vmatprep.subr.mxu0 0.0
    %1440 = vmatpush1.msra.mxu0 0.0
    %1441 = vmatprep.subr.mxu0 0.0
    %1442 = vmatpush1.msra.mxu0 0.0
    %1443 = vmatprep.mubr.f32.mxu0 0.0
    %1444 = vmatmul.mubr.f32.gmra.mrb[0].mxu0 %v1377
    %v1445 = vpop.f32.mrb[0].mxu0
    %v1446 = vadd.f32 0.0, %v1445
    %v1447 = vpop.f32.mrb[0].mxu0
    %1448 = vdwg.mxu0
    %v1449 = vadd.f32 %v1446, 1e-12
    %v1450 = vrsqrt.pop %v1449
    %v1451 = vmul.f32 %v1446, %v1450
    %v1452 = vadd.f32 %v1446, 1.0
    %v1453 = vrcp.pop %v1452
    %v1454 = vmul.f32 %v1451, %v1453
    %v1456 = vsel %vm590, %v1454, 0
    %1458 = vmatprep.subr.mxu0 0.0
    %1459 = vmatpush1.msra.mxu0 %v705
    %1460 = vmatprep.subr.mxu0 0.0
    %1461 = vmatpush1.msra.mxu0 0.0
    %1462 = vmatprep.subr.mxu0 0.0
    %1463 = vmatpush1.msra.mxu0 0.0
    %1464 = vmatprep.subr.mxu0 0.0
    %1465 = vmatpush1.msra.mxu0 0.0
    %1466 = vmatprep.subr.mxu0 0.0
    %1467 = vmatpush1.msra.mxu0 0.0
    %1468 = vmatprep.subr.mxu0 0.0
    %1469 = vmatpush1.msra.mxu0 0.0
    %1470 = vmatprep.subr.mxu0 0.0
    %1471 = vmatpush1.msra.mxu0 0.0
    %1472 = vmatprep.subr.mxu0 0.0
    %1473 = vmatpush1.msra.mxu0 0.0
    %1474 = vmatprep.subr.mxu0 0.0
    %1475 = vmatpush1.msra.mxu0 0.0
    %1476 = vmatprep.subr.mxu0 0.0
    %1477 = vmatpush1.msra.mxu0 0.0
    %1478 = vmatprep.subr.mxu0 0.0
    %1479 = vmatpush1.msra.mxu0 0.0
    %1480 = vmatprep.subr.mxu0 0.0
    %1481 = vmatpush1.msra.mxu0 0.0
    %1482 = vmatprep.subr.mxu0 0.0
    %1483 = vmatpush1.msra.mxu0 0.0
    %1484 = vmatprep.subr.mxu0 0.0
    %1485 = vmatpush1.msra.mxu0 0.0
    %1486 = vmatprep.subr.mxu0 0.0
    %1487 = vmatpush1.msra.mxu0 0.0
    %1488 = vmatprep.subr.mxu0 0.0
    %1489 = vmatpush1.msra.mxu0 0.0
    %1490 = vmatprep.subr.mxu0 0.0
    %1491 = vmatpush1.msra.mxu0 0.0
    %1492 = vmatprep.subr.mxu0 0.0
    %1493 = vmatpush1.msra.mxu0 0.0
    %1494 = vmatprep.subr.mxu0 0.0
    %1495 = vmatpush1.msra.mxu0 0.0
    %1496 = vmatprep.subr.mxu0 0.0
    %1497 = vmatpush1.msra.mxu0 0.0
    %1498 = vmatprep.subr.mxu0 0.0
    %1499 = vmatpush1.msra.mxu0 0.0
    %1500 = vmatprep.subr.mxu0 0.0
    %1501 = vmatpush1.msra.mxu0 0.0
    %1502 = vmatprep.subr.mxu0 0.0
    %1503 = vmatpush1.msra.mxu0 0.0
    %1504 = vmatprep.subr.mxu0 0.0
    %1505 = vmatpush1.msra.mxu0 0.0
    %1506 = vmatprep.subr.mxu0 0.0
    %1507 = vmatpush1.msra.mxu0 0.0
    %1508 = vmatprep.subr.mxu0 0.0
    %1509 = vmatpush1.msra.mxu0 0.0
    %1510 = vmatprep.subr.mxu0 0.0
    %1511 = vmatpush1.msra.mxu0 0.0
    %1512 = vmatprep.subr.mxu0 0.0
    %1513 = vmatpush1.msra.mxu0 0.0
    %1514 = vmatprep.subr.mxu0 0.0
    %1515 = vmatpush1.msra.mxu0 0.0
    %1516 = vmatprep.subr.mxu0 0.0
    %1517 = vmatpush1.msra.mxu0 0.0
    %1518 = vmatprep.subr.mxu0 0.0
    %1519 = vmatpush1.msra.mxu0 0.0
    %1520 = vmatprep.subr.mxu0 0.0
    %1521 = vmatpush1.msra.mxu0 0.0
    %1522 = vmatprep.mubr.f32.mxu0 0.0
    %1523 = vmatmul.mubr.f32.gmra.mrb[0].mxu0 %v1456
    %v1524 = vpop.f32.mrb[0].mxu0
    %v1525 = vadd.f32 0.0, %v1524
    %v1526 = vpop.f32.mrb[0].mxu0
    %1527 = vdwg.mxu0
    %v1528 = vmul.f32 %v1374, %v1525
    %v1529 = vmul.f32 %v113, %v1528
    %v1530 = vmul.f32 %v162, %v1528
    %v1531 = vmul.f32 %v211, %v1528
    %v1532 = vmul.f32 %v260, %v1528
    %v1533 = vmul.f32 %v309, %v1528
    %v1534 = vmul.f32 %v358, %v1528
    %v1535 = vmul.f32 %v407, %v1528
    %v1536 = vmul.f32 %v456, %v1528
    %v1538 = vsel %vm820, %v1529, 0
    %v1541 = vsel %vm820, %v1530, 0
    %v1544 = vsel %vm820, %v1531, 0
    %v1547 = vsel %vm820, %v1532, 0
    %v1550 = vsel %vm820, %v1533, 0
    %v1553 = vsel %vm820, %v1534, 0
    %v1556 = vsel %vm820, %v1535, 0
    %v1559 = vsel %vm820, %v1536, 0
    %1561 = vmatprep.subr.mxu0 0.0
    %1562 = vmatpush1.msra.mxu0 %v495
    %1563 = vmatprep.subr.mxu0 0.0
    %1564 = vmatpush1.msra.mxu0 %v496
    %1565 = vmatprep.subr.mxu0 0.0
    %1566 = vmatpush1.msra.mxu0 %v497
    %1567 = vmatprep.subr.mxu0 0.0
    %1568 = vmatpush1.msra.mxu0 %v498
    %1569 = vmatprep.subr.mxu0 0.0
    %1570 = vmatpush1.msra.mxu0 0.0
    %1571 = vmatprep.subr.mxu0 0.0
    %1572 = vmatpush1.msra.mxu0 0.0
    %1573 = vmatprep.subr.mxu0 0.0
    %1574 = vmatpush1.msra.mxu0 0.0
    %1575 = vmatprep.subr.mxu0 0.0
    %1576 = vmatpush1.msra.mxu0 0.0
    %1577 = vmatprep.subr.mxu0 0.0
    %1578 = vmatpush1.msra.mxu0 0.0
    %1579 = vmatprep.subr.mxu0 0.0
    %1580 = vmatpush1.msra.mxu0 0.0
    %1581 = vmatprep.subr.mxu0 0.0
    %1582 = vmatpush1.msra.mxu0 0.0
    %1583 = vmatprep.subr.mxu0 0.0
    %1584 = vmatpush1.msra.mxu0 0.0
    %1585 = vmatprep.subr.mxu0 0.0
    %1586 = vmatpush1.msra.mxu0 0.0
    %1587 = vmatprep.subr.mxu0 0.0
    %1588 = vmatpush1.msra.mxu0 0.0
    %1589 = vmatprep.subr.mxu0 0.0
    %1590 = vmatpush1.msra.mxu0 0.0
    %1591 = vmatprep.subr.mxu0 0.0
    %1592 = vmatpush1.msra.mxu0 0.0
    %1593 = vmatprep.subr.mxu0 0.0
    %1594 = vmatpush1.msra.mxu0 0.0
    %1595 = vmatprep.subr.mxu0 0.0
    %1596 = vmatpush1.msra.mxu0 0.0
    %1597 = vmatprep.subr.mxu0 0.0
    %1598 = vmatpush1.msra.mxu0 0.0
    %1599 = vmatprep.subr.mxu0 0.0
    %1600 = vmatpush1.msra.mxu0 0.0
    %1601 = vmatprep.subr.mxu0 0.0
    %1602 = vmatpush1.msra.mxu0 0.0
    %1603 = vmatprep.subr.mxu0 0.0
    %1604 = vmatpush1.msra.mxu0 0.0
    %1605 = vmatprep.subr.mxu0 0.0
    %1606 = vmatpush1.msra.mxu0 0.0
    %1607 = vmatprep.subr.mxu0 0.0
    %1608 = vmatpush1.msra.mxu0 0.0
    %1609 = vmatprep.subr.mxu0 0.0
    %1610 = vmatpush1.msra.mxu0 0.0
    %1611 = vmatprep.subr.mxu0 0.0
    %1612 = vmatpush1.msra.mxu0 0.0
    %1613 = vmatprep.subr.mxu0 0.0
    %1614 = vmatpush1.msra.mxu0 0.0
    %1615 = vmatprep.subr.mxu0 0.0
    %1616 = vmatpush1.msra.mxu0 0.0
    %1617 = vmatprep.subr.mxu0 0.0
    %1618 = vmatpush1.msra.mxu0 0.0
    %1619 = vmatprep.subr.mxu0 0.0
    %1620 = vmatpush1.msra.mxu0 0.0
    %1621 = vmatprep.subr.mxu0 0.0
    %1622 = vmatpush1.msra.mxu0 0.0
    %1623 = vmatprep.subr.mxu0 0.0
    %1624 = vmatpush1.msra.mxu0 0.0
    %1625 = vmatprep.mubr.f32.mxu0 0.0
    %1626 = vmatmul.mubr.f32.gmra.mrb[0].mxu0 %v1538
    %v1627 = vpop.f32.mrb[0].mxu0
    %v1628 = vadd.f32 0.0, %v1627
    %v1629 = vpop.f32.mrb[0].mxu0
    %1630 = vmatprep.mubr.f32.mxu0 0.0
    %1631 = vmatmul.mubr.f32.gmra.mrb[0].mxu0 %v1541
    %v1632 = vpop.f32.mrb[0].mxu0
    %v1633 = vadd.f32 0.0, %v1632
    %v1634 = vpop.f32.mrb[0].mxu0
    %1635 = vmatprep.mubr.f32.mxu0 0.0
    %1636 = vmatmul.mubr.f32.gmra.mrb[0].mxu0 %v1544
    %v1637 = vpop.f32.mrb[0].mxu0
    %v1638 = vadd.f32 0.0, %v1637
    %v1639 = vpop.f32.mrb[0].mxu0
    %1640 = vmatprep.mubr.f32.mxu0 0.0
    %1641 = vmatmul.mubr.f32.gmra.mrb[0].mxu0 %v1547
    %v1642 = vpop.f32.mrb[0].mxu0
    %v1643 = vadd.f32 0.0, %v1642
    %v1644 = vpop.f32.mrb[0].mxu0
    %1645 = vmatprep.mubr.f32.mxu0 0.0
    %1646 = vmatmul.mubr.f32.gmra.mrb[0].mxu0 %v1550
    %v1647 = vpop.f32.mrb[0].mxu0
    %v1648 = vadd.f32 0.0, %v1647
    %v1649 = vpop.f32.mrb[0].mxu0
    %1650 = vmatprep.mubr.f32.mxu0 0.0
    %1651 = vmatmul.mubr.f32.gmra.mrb[0].mxu0 %v1553
    %v1652 = vpop.f32.mrb[0].mxu0
    %v1653 = vadd.f32 0.0, %v1652
    %v1654 = vpop.f32.mrb[0].mxu0
    %1655 = vmatprep.mubr.f32.mxu0 0.0
    %1656 = vmatmul.mubr.f32.gmra.mrb[0].mxu0 %v1556
    %v1657 = vpop.f32.mrb[0].mxu0
    %v1658 = vadd.f32 0.0, %v1657
    %v1659 = vpop.f32.mrb[0].mxu0
    %1660 = vmatprep.mubr.f32.mxu0 0.0
    %1661 = vmatmul.mubr.f32.gmra.mrb[0].mxu0 %v1559
    %v1662 = vpop.f32.mrb[0].mxu0
    %v1663 = vadd.f32 0.0, %v1662
    %v1664 = vpop.f32.mrb[0].mxu0
    %1665 = vdwg.mxu0
    %v1666 = vadd.f32 %v1127, %v1628
    %v1667 = vadd.f32 %v1128, %v1633
    %v1668 = vadd.f32 %v1129, %v1638
    %v1669 = vadd.f32 %v1130, %v1643
    %v1670 = vadd.f32 %v1131, %v1648
    %v1671 = vadd.f32 %v1132, %v1653
    %v1672 = vadd.f32 %v1133, %v1658
    %v1673 = vadd.f32 %v1134, %v1663
    %v1674 = vsel %vm590, %v1666, -inf
    %1675 = vmax.xlane.f32.xlu0 %v1674
    %v1676 = vpop.xlane.xlu0 %1675
    %v1677 = vsel %vm590, %v1667, -inf
    %1678 = vmax.xlane.f32.xlu0 %v1677
    %v1679 = vpop.xlane.xlu0 %1678
    %v1680 = vsel %vm590, %v1668, -inf
    %1681 = vmax.xlane.f32.xlu0 %v1680
    %v1682 = vpop.xlane.xlu0 %1681
    %v1683 = vsel %vm590, %v1669, -inf
    %1684 = vmax.xlane.f32.xlu0 %v1683
    %v1685 = vpop.xlane.xlu0 %1684
    %v1686 = vsel %vm590, %v1670, -inf
    %1687 = vmax.xlane.f32.xlu0 %v1686
    %v1688 = vpop.xlane.xlu0 %1687
    %v1689 = vsel %vm590, %v1671, -inf
    %1690 = vmax.xlane.f32.xlu0 %v1689
    %v1691 = vpop.xlane.xlu0 %1690
    %v1692 = vsel %vm590, %v1672, -inf
    %1693 = vmax.xlane.f32.xlu0 %v1692
    %v1694 = vpop.xlane.xlu0 %1693
    %v1695 = vsel %vm590, %v1673, -inf
    %1696 = vmax.xlane.f32.xlu0 %v1695
    %v1697 = vpop.xlane.xlu0 %1696
    %v1698 = vsub.f32 %v1666, %v1676
    %v1699 = vsub.f32 %v1667, %v1679
    %v1700 = vsub.f32 %v1668, %v1682
    %v1701 = vsub.f32 %v1669, %v1685
    %v1702 = vsub.f32 %v1670, %v1688
    %v1703 = vsub.f32 %v1671, %v1691
    %v1704 = vsub.f32 %v1672, %v1694
    %v1705 = vsub.f32 %v1673, %v1697
    %v1706 = vmul.f32 %v1698, 1.442695
    %v1707 = vpow.pop %v1706
    %v1708 = vmul.f32 %v1699, 1.442695
    %v1709 = vpow.pop %v1708
    %v1710 = vmul.f32 %v1700, 1.442695
    %v1711 = vpow.pop %v1710
    %v1712 = vmul.f32 %v1701, 1.442695
    %v1713 = vpow.pop %v1712
    %v1714 = vmul.f32 %v1702, 1.442695
    %v1715 = vpow.pop %v1714
    %v1716 = vmul.f32 %v1703, 1.442695
    %v1717 = vpow.pop %v1716
    %v1718 = vmul.f32 %v1704, 1.442695
    %v1719 = vpow.pop %v1718
    %v1720 = vmul.f32 %v1705, 1.442695
    %v1721 = vpow.pop %v1720
    %v1722 = vsel %vm590, %v1707, 0.0
    %1723 = vadd.xlane.f32.xlu0 %v1722
    %v1724 = vpop.xlane.xlu0 %1723
    %v1725 = vsel %vm590, %v1709, 0.0
    %1726 = vadd.xlane.f32.xlu0 %v1725
    %v1727 = vpop.xlane.xlu0 %1726
    %v1728 = vsel %vm590, %v1711, 0.0
    %1729 = vadd.xlane.f32.xlu0 %v1728
    %v1730 = vpop.xlane.xlu0 %1729
    %v1731 = vsel %vm590, %v1713, 0.0
    %1732 = vadd.xlane.f32.xlu0 %v1731
    %v1733 = vpop.xlane.xlu0 %1732
    %v1734 = vsel %vm590, %v1715, 0.0
    %1735 = vadd.xlane.f32.xlu0 %v1734
    %v1736 = vpop.xlane.xlu0 %1735
    %v1737 = vsel %vm590, %v1717, 0.0
    %1738 = vadd.xlane.f32.xlu0 %v1737
    %v1739 = vpop.xlane.xlu0 %1738
    %v1740 = vsel %vm590, %v1719, 0.0
    %1741 = vadd.xlane.f32.xlu0 %v1740
    %v1742 = vpop.xlane.xlu0 %1741
    %v1743 = vsel %vm590, %v1721, 0.0
    %1744 = vadd.xlane.f32.xlu0 %v1743
    %v1745 = vpop.xlane.xlu0 %1744
    %v1746 = vrcp.pop %v1724
    %v1747 = vrcp.pop %v1727
    %v1748 = vrcp.pop %v1730
    %v1749 = vrcp.pop %v1733
    %v1750 = vrcp.pop %v1736
    %v1751 = vrcp.pop %v1739
    %v1752 = vrcp.pop %v1742
    %v1753 = vrcp.pop %v1745
    %v1754 = vmul.f32 %v1707, %v1746
    %v1755 = vmul.f32 %v1709, %v1747
    %v1756 = vmul.f32 %v1711, %v1748
    %v1757 = vmul.f32 %v1713, %v1749
    %v1758 = vmul.f32 %v1715, %v1750
    %v1759 = vmul.f32 %v1717, %v1751
    %v1760 = vmul.f32 %v1719, %v1752
    %v1761 = vmul.f32 %v1721, %v1753
    %v1763 = vsel %vm590, %v1754, 0
    %v1766 = vsel %vm590, %v1755, 0
    %v1769 = vsel %vm590, %v1756, 0
    %v1772 = vsel %vm590, %v1757, 0
    %v1775 = vsel %vm590, %v1758, 0
    %v1778 = vsel %vm590, %v1759, 0
    %v1781 = vsel %vm590, %v1760, 0
    %v1784 = vsel %vm590, %v1761, 0
    %1786 = vmatprep.subr.mxu0 0.0
    %1787 = vmatpush1.msra.mxu0 %v705
    %1788 = vmatprep.subr.mxu0 0.0
    %1789 = vmatpush1.msra.mxu0 0.0
    %1790 = vmatprep.subr.mxu0 0.0
    %1791 = vmatpush1.msra.mxu0 0.0
    %1792 = vmatprep.subr.mxu0 0.0
    %1793 = vmatpush1.msra.mxu0 0.0
    %1794 = vmatprep.subr.mxu0 0.0
    %1795 = vmatpush1.msra.mxu0 0.0
    %1796 = vmatprep.subr.mxu0 0.0
    %1797 = vmatpush1.msra.mxu0 0.0
    %1798 = vmatprep.subr.mxu0 0.0
    %1799 = vmatpush1.msra.mxu0 0.0
    %1800 = vmatprep.subr.mxu0 0.0
    %1801 = vmatpush1.msra.mxu0 0.0
    %1802 = vmatprep.subr.mxu0 0.0
    %1803 = vmatpush1.msra.mxu0 0.0
    %1804 = vmatprep.subr.mxu0 0.0
    %1805 = vmatpush1.msra.mxu0 0.0
    %1806 = vmatprep.subr.mxu0 0.0
    %1807 = vmatpush1.msra.mxu0 0.0
    %1808 = vmatprep.subr.mxu0 0.0
    %1809 = vmatpush1.msra.mxu0 0.0
    %1810 = vmatprep.subr.mxu0 0.0
    %1811 = vmatpush1.msra.mxu0 0.0
    %1812 = vmatprep.subr.mxu0 0.0
    %1813 = vmatpush1.msra.mxu0 0.0
    %1814 = vmatprep.subr.mxu0 0.0
    %1815 = vmatpush1.msra.mxu0 0.0
    %1816 = vmatprep.subr.mxu0 0.0
    %1817 = vmatpush1.msra.mxu0 0.0
    %1818 = vmatprep.subr.mxu0 0.0
    %1819 = vmatpush1.msra.mxu0 0.0
    %1820 = vmatprep.subr.mxu0 0.0
    %1821 = vmatpush1.msra.mxu0 0.0
    %1822 = vmatprep.subr.mxu0 0.0
    %1823 = vmatpush1.msra.mxu0 0.0
    %1824 = vmatprep.subr.mxu0 0.0
    %1825 = vmatpush1.msra.mxu0 0.0
    %1826 = vmatprep.subr.mxu0 0.0
    %1827 = vmatpush1.msra.mxu0 0.0
    %1828 = vmatprep.subr.mxu0 0.0
    %1829 = vmatpush1.msra.mxu0 0.0
    %1830 = vmatprep.subr.mxu0 0.0
    %1831 = vmatpush1.msra.mxu0 0.0
    %1832 = vmatprep.subr.mxu0 0.0
    %1833 = vmatpush1.msra.mxu0 0.0
    %1834 = vmatprep.subr.mxu0 0.0
    %1835 = vmatpush1.msra.mxu0 0.0
    %1836 = vmatprep.subr.mxu0 0.0
    %1837 = vmatpush1.msra.mxu0 0.0
    %1838 = vmatprep.subr.mxu0 0.0
    %1839 = vmatpush1.msra.mxu0 0.0
    %1840 = vmatprep.subr.mxu0 0.0
    %1841 = vmatpush1.msra.mxu0 0.0
    %1842 = vmatprep.subr.mxu0 0.0
    %1843 = vmatpush1.msra.mxu0 0.0
    %1844 = vmatprep.subr.mxu0 0.0
    %1845 = vmatpush1.msra.mxu0 0.0
    %1846 = vmatprep.subr.mxu0 0.0
    %1847 = vmatpush1.msra.mxu0 0.0
    %1848 = vmatprep.subr.mxu0 0.0
    %1849 = vmatpush1.msra.mxu0 0.0
    %1850 = vmatprep.mubr.f32.mxu0 0.0
    %1851 = vmatmul.mubr.f32.gmra.mrb[0].mxu0 %v1763
    %v1852 = vpop.f32.mrb[0].mxu0
    %v1853 = vadd.f32 0.0, %v1852
    %v1854 = vpop.f32.mrb[0].mxu0
    %1855 = vmatprep.mubr.f32.mxu0 0.0
    %1856 = vmatmul.mubr.f32.gmra.mrb[0].mxu0 %v1766
    %v1857 = vpop.f32.mrb[0].mxu0
    %v1858 = vadd.f32 0.0, %v1857
    %v1859 = vpop.f32.mrb[0].mxu0
    %1860 = vmatprep.mubr.f32.mxu0 0.0
    %1861 = vmatmul.mubr.f32.gmra.mrb[0].mxu0 %v1769
    %v1862 = vpop.f32.mrb[0].mxu0
    %v1863 = vadd.f32 0.0, %v1862
    %v1864 = vpop.f32.mrb[0].mxu0
    %1865 = vmatprep.mubr.f32.mxu0 0.0
    %1866 = vmatmul.mubr.f32.gmra.mrb[0].mxu0 %v1772
    %v1867 = vpop.f32.mrb[0].mxu0
    %v1868 = vadd.f32 0.0, %v1867
    %v1869 = vpop.f32.mrb[0].mxu0
    %1870 = vmatprep.mubr.f32.mxu0 0.0
    %1871 = vmatmul.mubr.f32.gmra.mrb[0].mxu0 %v1775
    %v1872 = vpop.f32.mrb[0].mxu0
    %v1873 = vadd.f32 0.0, %v1872
    %v1874 = vpop.f32.mrb[0].mxu0
    %1875 = vmatprep.mubr.f32.mxu0 0.0
    %1876 = vmatmul.mubr.f32.gmra.mrb[0].mxu0 %v1778
    %v1877 = vpop.f32.mrb[0].mxu0
    %v1878 = vadd.f32 0.0, %v1877
    %v1879 = vpop.f32.mrb[0].mxu0
    %1880 = vmatprep.mubr.f32.mxu0 0.0
    %1881 = vmatmul.mubr.f32.gmra.mrb[0].mxu0 %v1781
    %v1882 = vpop.f32.mrb[0].mxu0
    %v1883 = vadd.f32 0.0, %v1882
    %v1884 = vpop.f32.mrb[0].mxu0
    %1885 = vmatprep.mubr.f32.mxu0 0.0
    %1886 = vmatmul.mubr.f32.gmra.mrb[0].mxu0 %v1784
    %v1887 = vpop.f32.mrb[0].mxu0
    %v1888 = vadd.f32 0.0, %v1887
    %v1889 = vpop.f32.mrb[0].mxu0
    %1890 = vdwg.mxu0
    %v1891 = vmul.f32 %v1853, %v113
    %v1892 = vmul.f32 %v1858, %v162
    %v1893 = vmul.f32 %v1863, %v211
    %v1894 = vmul.f32 %v1868, %v260
    %v1895 = vmul.f32 %v1873, %v309
    %v1896 = vmul.f32 %v1878, %v358
    %v1897 = vmul.f32 %v1883, %v407
    %v1898 = vmul.f32 %v1888, %v456
    %v1899 = vsel %vm820, %v1891, 0.0
    %v1900 = vsel %vm820, %v1892, 0.0
    %v1901 = vadd.f32 %v1899, %v1900
    %v1902 = vsel %vm820, %v1893, 0.0
    %v1903 = vadd.f32 %v1901, %v1902
    %v1904 = vsel %vm820, %v1894, 0.0
    %v1905 = vadd.f32 %v1903, %v1904
    %v1906 = vsel %vm820, %v1895, 0.0
    %v1907 = vadd.f32 %v1905, %v1906
    %v1908 = vsel %vm820, %v1896, 0.0
    %v1909 = vadd.f32 %v1907, %v1908
    %v1910 = vsel %vm820, %v1897, 0.0
    %v1911 = vadd.f32 %v1909, %v1910
    %v1912 = vsel %vm820, %v1898, 0.0
    %v1913 = vadd.f32 %v1911, %v1912
    %v1914 = vmul.f32 %v1913, %v1913
    %v1916 = vsel %vm820, %v1914, 0
    %1918 = vmatprep.subr.mxu0 0.0
    %1919 = vmatpush1.msra.mxu0 %v495
    %1920 = vmatprep.subr.mxu0 0.0
    %1921 = vmatpush1.msra.mxu0 %v496
    %1922 = vmatprep.subr.mxu0 0.0
    %1923 = vmatpush1.msra.mxu0 %v497
    %1924 = vmatprep.subr.mxu0 0.0
    %1925 = vmatpush1.msra.mxu0 %v498
    %1926 = vmatprep.subr.mxu0 0.0
    %1927 = vmatpush1.msra.mxu0 0.0
    %1928 = vmatprep.subr.mxu0 0.0
    %1929 = vmatpush1.msra.mxu0 0.0
    %1930 = vmatprep.subr.mxu0 0.0
    %1931 = vmatpush1.msra.mxu0 0.0
    %1932 = vmatprep.subr.mxu0 0.0
    %1933 = vmatpush1.msra.mxu0 0.0
    %1934 = vmatprep.subr.mxu0 0.0
    %1935 = vmatpush1.msra.mxu0 0.0
    %1936 = vmatprep.subr.mxu0 0.0
    %1937 = vmatpush1.msra.mxu0 0.0
    %1938 = vmatprep.subr.mxu0 0.0
    %1939 = vmatpush1.msra.mxu0 0.0
    %1940 = vmatprep.subr.mxu0 0.0
    %1941 = vmatpush1.msra.mxu0 0.0
    %1942 = vmatprep.subr.mxu0 0.0
    %1943 = vmatpush1.msra.mxu0 0.0
    %1944 = vmatprep.subr.mxu0 0.0
    %1945 = vmatpush1.msra.mxu0 0.0
    %1946 = vmatprep.subr.mxu0 0.0
    %1947 = vmatpush1.msra.mxu0 0.0
    %1948 = vmatprep.subr.mxu0 0.0
    %1949 = vmatpush1.msra.mxu0 0.0
    %1950 = vmatprep.subr.mxu0 0.0
    %1951 = vmatpush1.msra.mxu0 0.0
    %1952 = vmatprep.subr.mxu0 0.0
    %1953 = vmatpush1.msra.mxu0 0.0
    %1954 = vmatprep.subr.mxu0 0.0
    %1955 = vmatpush1.msra.mxu0 0.0
    %1956 = vmatprep.subr.mxu0 0.0
    %1957 = vmatpush1.msra.mxu0 0.0
    %1958 = vmatprep.subr.mxu0 0.0
    %1959 = vmatpush1.msra.mxu0 0.0
    %1960 = vmatprep.subr.mxu0 0.0
    %1961 = vmatpush1.msra.mxu0 0.0
    %1962 = vmatprep.subr.mxu0 0.0
    %1963 = vmatpush1.msra.mxu0 0.0
    %1964 = vmatprep.subr.mxu0 0.0
    %1965 = vmatpush1.msra.mxu0 0.0
    %1966 = vmatprep.subr.mxu0 0.0
    %1967 = vmatpush1.msra.mxu0 0.0
    %1968 = vmatprep.subr.mxu0 0.0
    %1969 = vmatpush1.msra.mxu0 0.0
    %1970 = vmatprep.subr.mxu0 0.0
    %1971 = vmatpush1.msra.mxu0 0.0
    %1972 = vmatprep.subr.mxu0 0.0
    %1973 = vmatpush1.msra.mxu0 0.0
    %1974 = vmatprep.subr.mxu0 0.0
    %1975 = vmatpush1.msra.mxu0 0.0
    %1976 = vmatprep.subr.mxu0 0.0
    %1977 = vmatpush1.msra.mxu0 0.0
    %1978 = vmatprep.subr.mxu0 0.0
    %1979 = vmatpush1.msra.mxu0 0.0
    %1980 = vmatprep.subr.mxu0 0.0
    %1981 = vmatpush1.msra.mxu0 0.0
    %1982 = vmatprep.mubr.f32.mxu0 0.0
    %1983 = vmatmul.mubr.f32.gmra.mrb[0].mxu0 %v1916
    %v1984 = vpop.f32.mrb[0].mxu0
    %v1985 = vadd.f32 0.0, %v1984
    %v1986 = vpop.f32.mrb[0].mxu0
    %1987 = vdwg.mxu0
    %v1988 = vadd.f32 %v1985, 1e-12
    %v1989 = vrsqrt.pop %v1988
    %v1990 = vmul.f32 %v1985, %v1989
    %v1991 = vadd.f32 %v1985, 1.0
    %v1992 = vrcp.pop %v1991
    %v1993 = vmul.f32 %v1990, %v1992
    %v1995 = vsel %vm590, %v1993, 0
    %1997 = vmatprep.subr.mxu0 0.0
    %1998 = vmatpush1.msra.mxu0 %v705
    %1999 = vmatprep.subr.mxu0 0.0
    %2000 = vmatpush1.msra.mxu0 0.0
    %2001 = vmatprep.subr.mxu0 0.0
    %2002 = vmatpush1.msra.mxu0 0.0
    %2003 = vmatprep.subr.mxu0 0.0
    %2004 = vmatpush1.msra.mxu0 0.0
    %2005 = vmatprep.subr.mxu0 0.0
    %2006 = vmatpush1.msra.mxu0 0.0
    %2007 = vmatprep.subr.mxu0 0.0
    %2008 = vmatpush1.msra.mxu0 0.0
    %2009 = vmatprep.subr.mxu0 0.0
    %2010 = vmatpush1.msra.mxu0 0.0
    %2011 = vmatprep.subr.mxu0 0.0
    %2012 = vmatpush1.msra.mxu0 0.0
    %2013 = vmatprep.subr.mxu0 0.0
    %2014 = vmatpush1.msra.mxu0 0.0
    %2015 = vmatprep.subr.mxu0 0.0
    %2016 = vmatpush1.msra.mxu0 0.0
    %2017 = vmatprep.subr.mxu0 0.0
    %2018 = vmatpush1.msra.mxu0 0.0
    %2019 = vmatprep.subr.mxu0 0.0
    %2020 = vmatpush1.msra.mxu0 0.0
    %2021 = vmatprep.subr.mxu0 0.0
    %2022 = vmatpush1.msra.mxu0 0.0
    %2023 = vmatprep.subr.mxu0 0.0
    %2024 = vmatpush1.msra.mxu0 0.0
    %2025 = vmatprep.subr.mxu0 0.0
    %2026 = vmatpush1.msra.mxu0 0.0
    %2027 = vmatprep.subr.mxu0 0.0
    %2028 = vmatpush1.msra.mxu0 0.0
    %2029 = vmatprep.subr.mxu0 0.0
    %2030 = vmatpush1.msra.mxu0 0.0
    %2031 = vmatprep.subr.mxu0 0.0
    %2032 = vmatpush1.msra.mxu0 0.0
    %2033 = vmatprep.subr.mxu0 0.0
    %2034 = vmatpush1.msra.mxu0 0.0
    %2035 = vmatprep.subr.mxu0 0.0
    %2036 = vmatpush1.msra.mxu0 0.0
    %2037 = vmatprep.subr.mxu0 0.0
    %2038 = vmatpush1.msra.mxu0 0.0
    %2039 = vmatprep.subr.mxu0 0.0
    %2040 = vmatpush1.msra.mxu0 0.0
    %2041 = vmatprep.subr.mxu0 0.0
    %2042 = vmatpush1.msra.mxu0 0.0
    %2043 = vmatprep.subr.mxu0 0.0
    %2044 = vmatpush1.msra.mxu0 0.0
    %2045 = vmatprep.subr.mxu0 0.0
    %2046 = vmatpush1.msra.mxu0 0.0
    %2047 = vmatprep.subr.mxu0 0.0
    %2048 = vmatpush1.msra.mxu0 0.0
    %2049 = vmatprep.subr.mxu0 0.0
    %2050 = vmatpush1.msra.mxu0 0.0
    %2051 = vmatprep.subr.mxu0 0.0
    %2052 = vmatpush1.msra.mxu0 0.0
    %2053 = vmatprep.subr.mxu0 0.0
    %2054 = vmatpush1.msra.mxu0 0.0
    %2055 = vmatprep.subr.mxu0 0.0
    %2056 = vmatpush1.msra.mxu0 0.0
    %2057 = vmatprep.subr.mxu0 0.0
    %2058 = vmatpush1.msra.mxu0 0.0
    %2059 = vmatprep.subr.mxu0 0.0
    %2060 = vmatpush1.msra.mxu0 0.0
    %2061 = vmatprep.mubr.f32.mxu0 0.0
    %2062 = vmatmul.mubr.f32.gmra.mrb[0].mxu0 %v1995
    %v2063 = vpop.f32.mrb[0].mxu0
    %v2064 = vadd.f32 0.0, %v2063
    %v2065 = vpop.f32.mrb[0].mxu0
    %2066 = vdwg.mxu0
    %v2067 = vmul.f32 %v1913, %v2064
    %v2068 = vmul.f32 %v113, %v2067
    %v2069 = vmul.f32 %v162, %v2067
    %v2070 = vmul.f32 %v211, %v2067
    %v2071 = vmul.f32 %v260, %v2067
    %v2072 = vmul.f32 %v309, %v2067
    %v2073 = vmul.f32 %v358, %v2067
    %v2074 = vmul.f32 %v407, %v2067
    %v2075 = vmul.f32 %v456, %v2067
    %v2077 = vsel %vm820, %v2068, 0
    %v2080 = vsel %vm820, %v2069, 0
    %v2083 = vsel %vm820, %v2070, 0
    %v2086 = vsel %vm820, %v2071, 0
    %v2089 = vsel %vm820, %v2072, 0
    %v2092 = vsel %vm820, %v2073, 0
    %v2095 = vsel %vm820, %v2074, 0
    %v2098 = vsel %vm820, %v2075, 0
    %2100 = vmatprep.subr.mxu0 0.0
    %2101 = vmatpush1.msra.mxu0 %v495
    %2102 = vmatprep.subr.mxu0 0.0
    %2103 = vmatpush1.msra.mxu0 %v496
    %2104 = vmatprep.subr.mxu0 0.0
    %2105 = vmatpush1.msra.mxu0 %v497
    %2106 = vmatprep.subr.mxu0 0.0
    %2107 = vmatpush1.msra.mxu0 %v498
    %2108 = vmatprep.subr.mxu0 0.0
    %2109 = vmatpush1.msra.mxu0 0.0
    %2110 = vmatprep.subr.mxu0 0.0
    %2111 = vmatpush1.msra.mxu0 0.0
    %2112 = vmatprep.subr.mxu0 0.0
    %2113 = vmatpush1.msra.mxu0 0.0
    %2114 = vmatprep.subr.mxu0 0.0
    %2115 = vmatpush1.msra.mxu0 0.0
    %2116 = vmatprep.subr.mxu0 0.0
    %2117 = vmatpush1.msra.mxu0 0.0
    %2118 = vmatprep.subr.mxu0 0.0
    %2119 = vmatpush1.msra.mxu0 0.0
    %2120 = vmatprep.subr.mxu0 0.0
    %2121 = vmatpush1.msra.mxu0 0.0
    %2122 = vmatprep.subr.mxu0 0.0
    %2123 = vmatpush1.msra.mxu0 0.0
    %2124 = vmatprep.subr.mxu0 0.0
    %2125 = vmatpush1.msra.mxu0 0.0
    %2126 = vmatprep.subr.mxu0 0.0
    %2127 = vmatpush1.msra.mxu0 0.0
    %2128 = vmatprep.subr.mxu0 0.0
    %2129 = vmatpush1.msra.mxu0 0.0
    %2130 = vmatprep.subr.mxu0 0.0
    %2131 = vmatpush1.msra.mxu0 0.0
    %2132 = vmatprep.subr.mxu0 0.0
    %2133 = vmatpush1.msra.mxu0 0.0
    %2134 = vmatprep.subr.mxu0 0.0
    %2135 = vmatpush1.msra.mxu0 0.0
    %2136 = vmatprep.subr.mxu0 0.0
    %2137 = vmatpush1.msra.mxu0 0.0
    %2138 = vmatprep.subr.mxu0 0.0
    %2139 = vmatpush1.msra.mxu0 0.0
    %2140 = vmatprep.subr.mxu0 0.0
    %2141 = vmatpush1.msra.mxu0 0.0
    %2142 = vmatprep.subr.mxu0 0.0
    %2143 = vmatpush1.msra.mxu0 0.0
    %2144 = vmatprep.subr.mxu0 0.0
    %2145 = vmatpush1.msra.mxu0 0.0
    %2146 = vmatprep.subr.mxu0 0.0
    %2147 = vmatpush1.msra.mxu0 0.0
    %2148 = vmatprep.subr.mxu0 0.0
    %2149 = vmatpush1.msra.mxu0 0.0
    %2150 = vmatprep.subr.mxu0 0.0
    %2151 = vmatpush1.msra.mxu0 0.0
    %2152 = vmatprep.subr.mxu0 0.0
    %2153 = vmatpush1.msra.mxu0 0.0
    %2154 = vmatprep.subr.mxu0 0.0
    %2155 = vmatpush1.msra.mxu0 0.0
    %2156 = vmatprep.subr.mxu0 0.0
    %2157 = vmatpush1.msra.mxu0 0.0
    %2158 = vmatprep.subr.mxu0 0.0
    %2159 = vmatpush1.msra.mxu0 0.0
    %2160 = vmatprep.subr.mxu0 0.0
    %2161 = vmatpush1.msra.mxu0 0.0
    %2162 = vmatprep.subr.mxu0 0.0
    %2163 = vmatpush1.msra.mxu0 0.0
    %2164 = vmatprep.mubr.f32.mxu0 0.0
    %2165 = vmatmul.mubr.f32.gmra.mrb[0].mxu0 %v2077
    %v2166 = vpop.f32.mrb[0].mxu0
    %v2167 = vadd.f32 0.0, %v2166
    %v2168 = vpop.f32.mrb[0].mxu0
    %2169 = vmatprep.mubr.f32.mxu0 0.0
    %2170 = vmatmul.mubr.f32.gmra.mrb[0].mxu0 %v2080
    %v2171 = vpop.f32.mrb[0].mxu0
    %v2172 = vadd.f32 0.0, %v2171
    %v2173 = vpop.f32.mrb[0].mxu0
    %2174 = vmatprep.mubr.f32.mxu0 0.0
    %2175 = vmatmul.mubr.f32.gmra.mrb[0].mxu0 %v2083
    %v2176 = vpop.f32.mrb[0].mxu0
    %v2177 = vadd.f32 0.0, %v2176
    %v2178 = vpop.f32.mrb[0].mxu0
    %2179 = vmatprep.mubr.f32.mxu0 0.0
    %2180 = vmatmul.mubr.f32.gmra.mrb[0].mxu0 %v2086
    %v2181 = vpop.f32.mrb[0].mxu0
    %v2182 = vadd.f32 0.0, %v2181
    %v2183 = vpop.f32.mrb[0].mxu0
    %2184 = vmatprep.mubr.f32.mxu0 0.0
    %2185 = vmatmul.mubr.f32.gmra.mrb[0].mxu0 %v2089
    %v2186 = vpop.f32.mrb[0].mxu0
    %v2187 = vadd.f32 0.0, %v2186
    %v2188 = vpop.f32.mrb[0].mxu0
    %2189 = vmatprep.mubr.f32.mxu0 0.0
    %2190 = vmatmul.mubr.f32.gmra.mrb[0].mxu0 %v2092
    %v2191 = vpop.f32.mrb[0].mxu0
    %v2192 = vadd.f32 0.0, %v2191
    %v2193 = vpop.f32.mrb[0].mxu0
    %2194 = vmatprep.mubr.f32.mxu0 0.0
    %2195 = vmatmul.mubr.f32.gmra.mrb[0].mxu0 %v2095
    %v2196 = vpop.f32.mrb[0].mxu0
    %v2197 = vadd.f32 0.0, %v2196
    %v2198 = vpop.f32.mrb[0].mxu0
    %2199 = vmatprep.mubr.f32.mxu0 0.0
    %2200 = vmatmul.mubr.f32.gmra.mrb[0].mxu0 %v2098
    %v2201 = vpop.f32.mrb[0].mxu0
    %v2202 = vadd.f32 0.0, %v2201
    %v2203 = vpop.f32.mrb[0].mxu0
    %2204 = vdwg.mxu0
    %v2205 = vadd.f32 %v1666, %v2167
    %v2206 = vadd.f32 %v1667, %v2172
    %v2207 = vadd.f32 %v1668, %v2177
    %v2208 = vadd.f32 %v1669, %v2182
    %v2209 = vadd.f32 %v1670, %v2187
    %v2210 = vadd.f32 %v1671, %v2192
    %v2211 = vadd.f32 %v1672, %v2197
    %v2212 = vadd.f32 %v1673, %v2202
    %v2213 = vsel %vm590, %v2205, -inf
    %2214 = vmax.xlane.f32.xlu0 %v2213
    %v2215 = vpop.xlane.xlu0 %2214
    %v2216 = vsel %vm590, %v2206, -inf
    %2217 = vmax.xlane.f32.xlu0 %v2216
    %v2218 = vpop.xlane.xlu0 %2217
    %v2219 = vsel %vm590, %v2207, -inf
    %2220 = vmax.xlane.f32.xlu0 %v2219
    %v2221 = vpop.xlane.xlu0 %2220
    %v2222 = vsel %vm590, %v2208, -inf
    %2223 = vmax.xlane.f32.xlu0 %v2222
    %v2224 = vpop.xlane.xlu0 %2223
    %v2225 = vsel %vm590, %v2209, -inf
    %2226 = vmax.xlane.f32.xlu0 %v2225
    %v2227 = vpop.xlane.xlu0 %2226
    %v2228 = vsel %vm590, %v2210, -inf
    %2229 = vmax.xlane.f32.xlu0 %v2228
    %v2230 = vpop.xlane.xlu0 %2229
    %v2231 = vsel %vm590, %v2211, -inf
    %2232 = vmax.xlane.f32.xlu0 %v2231
    %v2233 = vpop.xlane.xlu0 %2232
    %v2234 = vsel %vm590, %v2212, -inf
    %2235 = vmax.xlane.f32.xlu0 %v2234
    %v2236 = vpop.xlane.xlu0 %2235
    %v2237 = vsub.f32 %v2205, %v2215
    %v2238 = vsub.f32 %v2206, %v2218
    %v2239 = vsub.f32 %v2207, %v2221
    %v2240 = vsub.f32 %v2208, %v2224
    %v2241 = vsub.f32 %v2209, %v2227
    %v2242 = vsub.f32 %v2210, %v2230
    %v2243 = vsub.f32 %v2211, %v2233
    %v2244 = vsub.f32 %v2212, %v2236
    %v2245 = vmul.f32 %v2237, 1.442695
    %v2246 = vpow.pop %v2245
    %v2247 = vmul.f32 %v2238, 1.442695
    %v2248 = vpow.pop %v2247
    %v2249 = vmul.f32 %v2239, 1.442695
    %v2250 = vpow.pop %v2249
    %v2251 = vmul.f32 %v2240, 1.442695
    %v2252 = vpow.pop %v2251
    %v2253 = vmul.f32 %v2241, 1.442695
    %v2254 = vpow.pop %v2253
    %v2255 = vmul.f32 %v2242, 1.442695
    %v2256 = vpow.pop %v2255
    %v2257 = vmul.f32 %v2243, 1.442695
    %v2258 = vpow.pop %v2257
    %v2259 = vmul.f32 %v2244, 1.442695
    %v2260 = vpow.pop %v2259
    %v2261 = vsel %vm590, %v2246, 0.0
    %2262 = vadd.xlane.f32.xlu0 %v2261
    %v2263 = vpop.xlane.xlu0 %2262
    %v2264 = vsel %vm590, %v2248, 0.0
    %2265 = vadd.xlane.f32.xlu0 %v2264
    %v2266 = vpop.xlane.xlu0 %2265
    %v2267 = vsel %vm590, %v2250, 0.0
    %2268 = vadd.xlane.f32.xlu0 %v2267
    %v2269 = vpop.xlane.xlu0 %2268
    %v2270 = vsel %vm590, %v2252, 0.0
    %2271 = vadd.xlane.f32.xlu0 %v2270
    %v2272 = vpop.xlane.xlu0 %2271
    %v2273 = vsel %vm590, %v2254, 0.0
    %2274 = vadd.xlane.f32.xlu0 %v2273
    %v2275 = vpop.xlane.xlu0 %2274
    %v2276 = vsel %vm590, %v2256, 0.0
    %2277 = vadd.xlane.f32.xlu0 %v2276
    %v2278 = vpop.xlane.xlu0 %2277
    %v2279 = vsel %vm590, %v2258, 0.0
    %2280 = vadd.xlane.f32.xlu0 %v2279
    %v2281 = vpop.xlane.xlu0 %2280
    %v2282 = vsel %vm590, %v2260, 0.0
    %2283 = vadd.xlane.f32.xlu0 %v2282
    %v2284 = vpop.xlane.xlu0 %2283
    %v2285 = vrcp.pop %v2263
    %v2286 = vrcp.pop %v2266
    %v2287 = vrcp.pop %v2269
    %v2288 = vrcp.pop %v2272
    %v2289 = vrcp.pop %v2275
    %v2290 = vrcp.pop %v2278
    %v2291 = vrcp.pop %v2281
    %v2292 = vrcp.pop %v2284
    %v2293 = vmul.f32 %v2246, %v2285
    %v2294 = vmul.f32 %v2248, %v2286
    %v2295 = vmul.f32 %v2250, %v2287
    %v2296 = vmul.f32 %v2252, %v2288
    %v2297 = vmul.f32 %v2254, %v2289
    %v2298 = vmul.f32 %v2256, %v2290
    %v2299 = vmul.f32 %v2258, %v2291
    %v2300 = vmul.f32 %v2260, %v2292
    %v2302 = vsel %vm590, %v2293, 0
    %v2305 = vsel %vm590, %v2294, 0
    %v2308 = vsel %vm590, %v2295, 0
    %v2311 = vsel %vm590, %v2296, 0
    %v2314 = vsel %vm590, %v2297, 0
    %v2317 = vsel %vm590, %v2298, 0
    %v2320 = vsel %vm590, %v2299, 0
    %v2323 = vsel %vm590, %v2300, 0
    %2325 = vmatprep.subr.mxu0 0.0
    %2326 = vmatpush1.msra.mxu0 %v705
    %2327 = vmatprep.subr.mxu0 0.0
    %2328 = vmatpush1.msra.mxu0 0.0
    %2329 = vmatprep.subr.mxu0 0.0
    %2330 = vmatpush1.msra.mxu0 0.0
    %2331 = vmatprep.subr.mxu0 0.0
    %2332 = vmatpush1.msra.mxu0 0.0
    %2333 = vmatprep.subr.mxu0 0.0
    %2334 = vmatpush1.msra.mxu0 0.0
    %2335 = vmatprep.subr.mxu0 0.0
    %2336 = vmatpush1.msra.mxu0 0.0
    %2337 = vmatprep.subr.mxu0 0.0
    %2338 = vmatpush1.msra.mxu0 0.0
    %2339 = vmatprep.subr.mxu0 0.0
    %2340 = vmatpush1.msra.mxu0 0.0
    %2341 = vmatprep.subr.mxu0 0.0
    %2342 = vmatpush1.msra.mxu0 0.0
    %2343 = vmatprep.subr.mxu0 0.0
    %2344 = vmatpush1.msra.mxu0 0.0
    %2345 = vmatprep.subr.mxu0 0.0
    %2346 = vmatpush1.msra.mxu0 0.0
    %2347 = vmatprep.subr.mxu0 0.0
    %2348 = vmatpush1.msra.mxu0 0.0
    %2349 = vmatprep.subr.mxu0 0.0
    %2350 = vmatpush1.msra.mxu0 0.0
    %2351 = vmatprep.subr.mxu0 0.0
    %2352 = vmatpush1.msra.mxu0 0.0
    %2353 = vmatprep.subr.mxu0 0.0
    %2354 = vmatpush1.msra.mxu0 0.0
    %2355 = vmatprep.subr.mxu0 0.0
    %2356 = vmatpush1.msra.mxu0 0.0
    %2357 = vmatprep.subr.mxu0 0.0
    %2358 = vmatpush1.msra.mxu0 0.0
    %2359 = vmatprep.subr.mxu0 0.0
    %2360 = vmatpush1.msra.mxu0 0.0
    %2361 = vmatprep.subr.mxu0 0.0
    %2362 = vmatpush1.msra.mxu0 0.0
    %2363 = vmatprep.subr.mxu0 0.0
    %2364 = vmatpush1.msra.mxu0 0.0
    %2365 = vmatprep.subr.mxu0 0.0
    %2366 = vmatpush1.msra.mxu0 0.0
    %2367 = vmatprep.subr.mxu0 0.0
    %2368 = vmatpush1.msra.mxu0 0.0
    %2369 = vmatprep.subr.mxu0 0.0
    %2370 = vmatpush1.msra.mxu0 0.0
    %2371 = vmatprep.subr.mxu0 0.0
    %2372 = vmatpush1.msra.mxu0 0.0
    %2373 = vmatprep.subr.mxu0 0.0
    %2374 = vmatpush1.msra.mxu0 0.0
    %2375 = vmatprep.subr.mxu0 0.0
    %2376 = vmatpush1.msra.mxu0 0.0
    %2377 = vmatprep.subr.mxu0 0.0
    %2378 = vmatpush1.msra.mxu0 0.0
    %2379 = vmatprep.subr.mxu0 0.0
    %2380 = vmatpush1.msra.mxu0 0.0
    %2381 = vmatprep.subr.mxu0 0.0
    %2382 = vmatpush1.msra.mxu0 0.0
    %2383 = vmatprep.subr.mxu0 0.0
    %2384 = vmatpush1.msra.mxu0 0.0
    %2385 = vmatprep.subr.mxu0 0.0
    %2386 = vmatpush1.msra.mxu0 0.0
    %2387 = vmatprep.subr.mxu0 0.0
    %2388 = vmatpush1.msra.mxu0 0.0
    %2389 = vmatprep.mubr.f32.mxu0 0.0
    %2390 = vmatmul.mubr.f32.gmra.mrb[0].mxu0 %v2302
    %v2391 = vpop.f32.mrb[0].mxu0
    %v2392 = vadd.f32 0.0, %v2391
    %v2393 = vpop.f32.mrb[0].mxu0
    %2394 = vmatprep.mubr.f32.mxu0 0.0
    %2395 = vmatmul.mubr.f32.gmra.mrb[0].mxu0 %v2305
    %v2396 = vpop.f32.mrb[0].mxu0
    %v2397 = vadd.f32 0.0, %v2396
    %v2398 = vpop.f32.mrb[0].mxu0
    %2399 = vmatprep.mubr.f32.mxu0 0.0
    %2400 = vmatmul.mubr.f32.gmra.mrb[0].mxu0 %v2308
    %v2401 = vpop.f32.mrb[0].mxu0
    %v2402 = vadd.f32 0.0, %v2401
    %v2403 = vpop.f32.mrb[0].mxu0
    %2404 = vmatprep.mubr.f32.mxu0 0.0
    %2405 = vmatmul.mubr.f32.gmra.mrb[0].mxu0 %v2311
    %v2406 = vpop.f32.mrb[0].mxu0
    %v2407 = vadd.f32 0.0, %v2406
    %v2408 = vpop.f32.mrb[0].mxu0
    %2409 = vmatprep.mubr.f32.mxu0 0.0
    %2410 = vmatmul.mubr.f32.gmra.mrb[0].mxu0 %v2314
    %v2411 = vpop.f32.mrb[0].mxu0
    %v2412 = vadd.f32 0.0, %v2411
    %v2413 = vpop.f32.mrb[0].mxu0
    %2414 = vmatprep.mubr.f32.mxu0 0.0
    %2415 = vmatmul.mubr.f32.gmra.mrb[0].mxu0 %v2317
    %v2416 = vpop.f32.mrb[0].mxu0
    %v2417 = vadd.f32 0.0, %v2416
    %v2418 = vpop.f32.mrb[0].mxu0
    %2419 = vmatprep.mubr.f32.mxu0 0.0
    %2420 = vmatmul.mubr.f32.gmra.mrb[0].mxu0 %v2320
    %v2421 = vpop.f32.mrb[0].mxu0
    %v2422 = vadd.f32 0.0, %v2421
    %v2423 = vpop.f32.mrb[0].mxu0
    %2424 = vmatprep.mubr.f32.mxu0 0.0
    %2425 = vmatmul.mubr.f32.gmra.mrb[0].mxu0 %v2323
    %v2426 = vpop.f32.mrb[0].mxu0
    %v2427 = vadd.f32 0.0, %v2426
    %v2428 = vpop.f32.mrb[0].mxu0
    %2429 = vdwg.mxu0
    %v2430 = vmul.f32 %v2392, %v113
    %v2431 = vmul.f32 %v2397, %v162
    %v2432 = vmul.f32 %v2402, %v211
    %v2433 = vmul.f32 %v2407, %v260
    %v2434 = vmul.f32 %v2412, %v309
    %v2435 = vmul.f32 %v2417, %v358
    %v2436 = vmul.f32 %v2422, %v407
    %v2437 = vmul.f32 %v2427, %v456
    %v2438 = vsel %vm820, %v2430, 0.0
    %v2439 = vsel %vm820, %v2431, 0.0
    %v2440 = vadd.f32 %v2438, %v2439
    %v2441 = vsel %vm820, %v2432, 0.0
    %v2442 = vadd.f32 %v2440, %v2441
    %v2443 = vsel %vm820, %v2433, 0.0
    %v2444 = vadd.f32 %v2442, %v2443
    %v2445 = vsel %vm820, %v2434, 0.0
    %v2446 = vadd.f32 %v2444, %v2445
    %v2447 = vsel %vm820, %v2435, 0.0
    %v2448 = vadd.f32 %v2446, %v2447
    %v2449 = vsel %vm820, %v2436, 0.0
    %v2450 = vadd.f32 %v2448, %v2449
    %v2451 = vsel %vm820, %v2437, 0.0
    %v2452 = vadd.f32 %v2450, %v2451
    %v2453 = vmul.f32 %v2452, %v2452
    %v2455 = vsel %vm820, %v2453, 0
    %2457 = vmatprep.subr.mxu0 0.0
    %2458 = vmatpush1.msra.mxu0 %v495
    %2459 = vmatprep.subr.mxu0 0.0
    %2460 = vmatpush1.msra.mxu0 %v496
    %2461 = vmatprep.subr.mxu0 0.0
    %2462 = vmatpush1.msra.mxu0 %v497
    %2463 = vmatprep.subr.mxu0 0.0
    %2464 = vmatpush1.msra.mxu0 %v498
    %2465 = vmatprep.subr.mxu0 0.0
    %2466 = vmatpush1.msra.mxu0 0.0
    %2467 = vmatprep.subr.mxu0 0.0
    %2468 = vmatpush1.msra.mxu0 0.0
    %2469 = vmatprep.subr.mxu0 0.0
    %2470 = vmatpush1.msra.mxu0 0.0
    %2471 = vmatprep.subr.mxu0 0.0
    %2472 = vmatpush1.msra.mxu0 0.0
    %2473 = vmatprep.subr.mxu0 0.0
    %2474 = vmatpush1.msra.mxu0 0.0
    %2475 = vmatprep.subr.mxu0 0.0
    %2476 = vmatpush1.msra.mxu0 0.0
    %2477 = vmatprep.subr.mxu0 0.0
    %2478 = vmatpush1.msra.mxu0 0.0
    %2479 = vmatprep.subr.mxu0 0.0
    %2480 = vmatpush1.msra.mxu0 0.0
    %2481 = vmatprep.subr.mxu0 0.0
    %2482 = vmatpush1.msra.mxu0 0.0
    %2483 = vmatprep.subr.mxu0 0.0
    %2484 = vmatpush1.msra.mxu0 0.0
    %2485 = vmatprep.subr.mxu0 0.0
    %2486 = vmatpush1.msra.mxu0 0.0
    %2487 = vmatprep.subr.mxu0 0.0
    %2488 = vmatpush1.msra.mxu0 0.0
    %2489 = vmatprep.subr.mxu0 0.0
    %2490 = vmatpush1.msra.mxu0 0.0
    %2491 = vmatprep.subr.mxu0 0.0
    %2492 = vmatpush1.msra.mxu0 0.0
    %2493 = vmatprep.subr.mxu0 0.0
    %2494 = vmatpush1.msra.mxu0 0.0
    %2495 = vmatprep.subr.mxu0 0.0
    %2496 = vmatpush1.msra.mxu0 0.0
    %2497 = vmatprep.subr.mxu0 0.0
    %2498 = vmatpush1.msra.mxu0 0.0
    %2499 = vmatprep.subr.mxu0 0.0
    %2500 = vmatpush1.msra.mxu0 0.0
    %2501 = vmatprep.subr.mxu0 0.0
    %2502 = vmatpush1.msra.mxu0 0.0
    %2503 = vmatprep.subr.mxu0 0.0
    %2504 = vmatpush1.msra.mxu0 0.0
    %2505 = vmatprep.subr.mxu0 0.0
    %2506 = vmatpush1.msra.mxu0 0.0
    %2507 = vmatprep.subr.mxu0 0.0
    %2508 = vmatpush1.msra.mxu0 0.0
    %2509 = vmatprep.subr.mxu0 0.0
    %2510 = vmatpush1.msra.mxu0 0.0
    %2511 = vmatprep.subr.mxu0 0.0
    %2512 = vmatpush1.msra.mxu0 0.0
    %2513 = vmatprep.subr.mxu0 0.0
    %2514 = vmatpush1.msra.mxu0 0.0
    %2515 = vmatprep.subr.mxu0 0.0
    %2516 = vmatpush1.msra.mxu0 0.0
    %2517 = vmatprep.subr.mxu0 0.0
    %2518 = vmatpush1.msra.mxu0 0.0
    %2519 = vmatprep.subr.mxu0 0.0
    %2520 = vmatpush1.msra.mxu0 0.0
    %2521 = vmatprep.mubr.f32.mxu0 0.0
    %2522 = vmatmul.mubr.f32.gmra.mrb[0].mxu0 %v2455
    %v2523 = vpop.f32.mrb[0].mxu0
    %v2524 = vadd.f32 0.0, %v2523
    %v2525 = vpop.f32.mrb[0].mxu0
    %2526 = vdwg.mxu0
    %v2527 = vadd.f32 %v2524, 1e-12
    %v2528 = vrsqrt.pop %v2527
    %v2529 = vmul.f32 %v2524, %v2528
    %v2530 = vadd.f32 %v2524, 1.0
    %v2531 = vrcp.pop %v2530
    %v2532 = vmul.f32 %v2529, %v2531
    %v2534 = vsel %vm590, %v2532, 0
    %2536 = vmatprep.subr.mxu0 0.0
    %2537 = vmatpush1.msra.mxu0 %v705
    %2538 = vmatprep.subr.mxu0 0.0
    %2539 = vmatpush1.msra.mxu0 0.0
    %2540 = vmatprep.subr.mxu0 0.0
    %2541 = vmatpush1.msra.mxu0 0.0
    %2542 = vmatprep.subr.mxu0 0.0
    %2543 = vmatpush1.msra.mxu0 0.0
    %2544 = vmatprep.subr.mxu0 0.0
    %2545 = vmatpush1.msra.mxu0 0.0
    %2546 = vmatprep.subr.mxu0 0.0
    %2547 = vmatpush1.msra.mxu0 0.0
    %2548 = vmatprep.subr.mxu0 0.0
    %2549 = vmatpush1.msra.mxu0 0.0
    %2550 = vmatprep.subr.mxu0 0.0
    %2551 = vmatpush1.msra.mxu0 0.0
    %2552 = vmatprep.subr.mxu0 0.0
    %2553 = vmatpush1.msra.mxu0 0.0
    %2554 = vmatprep.subr.mxu0 0.0
    %2555 = vmatpush1.msra.mxu0 0.0
    %2556 = vmatprep.subr.mxu0 0.0
    %2557 = vmatpush1.msra.mxu0 0.0
    %2558 = vmatprep.subr.mxu0 0.0
    %2559 = vmatpush1.msra.mxu0 0.0
    %2560 = vmatprep.subr.mxu0 0.0
    %2561 = vmatpush1.msra.mxu0 0.0
    %2562 = vmatprep.subr.mxu0 0.0
    %2563 = vmatpush1.msra.mxu0 0.0
    %2564 = vmatprep.subr.mxu0 0.0
    %2565 = vmatpush1.msra.mxu0 0.0
    %2566 = vmatprep.subr.mxu0 0.0
    %2567 = vmatpush1.msra.mxu0 0.0
    %2568 = vmatprep.subr.mxu0 0.0
    %2569 = vmatpush1.msra.mxu0 0.0
    %2570 = vmatprep.subr.mxu0 0.0
    %2571 = vmatpush1.msra.mxu0 0.0
    %2572 = vmatprep.subr.mxu0 0.0
    %2573 = vmatpush1.msra.mxu0 0.0
    %2574 = vmatprep.subr.mxu0 0.0
    %2575 = vmatpush1.msra.mxu0 0.0
    %2576 = vmatprep.subr.mxu0 0.0
    %2577 = vmatpush1.msra.mxu0 0.0
    %2578 = vmatprep.subr.mxu0 0.0
    %2579 = vmatpush1.msra.mxu0 0.0
    %2580 = vmatprep.subr.mxu0 0.0
    %2581 = vmatpush1.msra.mxu0 0.0
    %2582 = vmatprep.subr.mxu0 0.0
    %2583 = vmatpush1.msra.mxu0 0.0
    %2584 = vmatprep.subr.mxu0 0.0
    %2585 = vmatpush1.msra.mxu0 0.0
    %2586 = vmatprep.subr.mxu0 0.0
    %2587 = vmatpush1.msra.mxu0 0.0
    %2588 = vmatprep.subr.mxu0 0.0
    %2589 = vmatpush1.msra.mxu0 0.0
    %2590 = vmatprep.subr.mxu0 0.0
    %2591 = vmatpush1.msra.mxu0 0.0
    %2592 = vmatprep.subr.mxu0 0.0
    %2593 = vmatpush1.msra.mxu0 0.0
    %2594 = vmatprep.subr.mxu0 0.0
    %2595 = vmatpush1.msra.mxu0 0.0
    %2596 = vmatprep.subr.mxu0 0.0
    %2597 = vmatpush1.msra.mxu0 0.0
    %2598 = vmatprep.subr.mxu0 0.0
    %2599 = vmatpush1.msra.mxu0 0.0
    %2600 = vmatprep.mubr.f32.mxu0 0.0
    %2601 = vmatmul.mubr.f32.gmra.mrb[0].mxu0 %v2534
    %v2602 = vpop.f32.mrb[0].mxu0
    %v2603 = vadd.f32 0.0, %v2602
    %v2604 = vpop.f32.mrb[0].mxu0
    %2605 = vdwg.mxu0
    %v2606 = vmul.f32 %v2452, %v2603
    %v2607 = vsel %vm820, %v2606, 0.0
    %2608 = vst [vmem:[#allocation7] sm:$0xff] %v2607
    // Predicated region
    $region22: #{tpu_custom_call.1} parent=1 // pred_check
      _
    $region23: #{tpu_custom_call.1} parent=1 // pred_check_branch
      %2610 = sbr.rel (0) target = $region25
    $region24: #{tpu_custom_call.1} parent=1 // pred_region
      %s2612 = ssub.s32 128, 128
      %2613 = vsyncadd [#allocation4], %s2612
      %s2615 = sshll.u32 [#allocation7], 4
      %s2616 = int_to_ptr.vmem [resolvable:$true] %s2615
      %2618 = dma.vmem_to_hbm [thread:$0]  %s2616, 128, %s3, [#allocation4]
    $region25: #{tpu_custom_call.1} parent=1 // pred_fallthru
      _
    // Predicated region
    $region26: #{tpu_custom_call.1} parent=1 // pred_check
      _
    $region27: #{tpu_custom_call.1} parent=1 // pred_check_branch
      %2620 = sbr.rel (0) target = $region29
    $region28: #{tpu_custom_call.1} parent=1 // pred_region
      %2621 = dma.done [#allocation4], 128
    $region29: #{tpu_custom_call.1} parent=1 // pred_fallthru
      _
    %2622 = vsyncpa [#allocation3], 1
    %2623 = vsyncpa [#allocation6], 1
    %2624 = vsyncpa [#allocation4], 1

</llo_original>
